<compile_context>
chip_gen: v6e
topology: v6e:2x2x1
jax: 0.10.0
libtpu: 0.0.40
codegen_flags: <defaults>
</compile_context>

<pallas_src>
import functools

import jax
import jax.numpy as jnp
from jax.experimental import pallas as pl
from jax.experimental.pallas import tpu as pltpu


def _kmeans_kernel(x_ref, c_ref, cn_ref, o_ref):
    # x_ref:  (tm, F)   block of input rows
    # c_ref:  (K, F)    cluster centers
    # cn_ref: (K, 1)    squared norms of centers
    # o_ref:  (1, tm)   int32 cluster ids (lane-major)
    x = x_ref[...].astype(jnp.float32)          # (tm, F)
    c = c_ref[...].astype(jnp.float32)          # (K, F)
    cn = cn_ref[...].astype(jnp.float32)        # (K, 1)

    # (K, tm) = centers . x^T  (contract the feature axis of both operands —
    # the standard attention-score pattern, keeps rows in the lane dim).
    xc_t = jax.lax.dot_general(
        c, x,
        dimension_numbers=(((1,), (1,)), ((), ())),
        precision=jax.lax.Precision.HIGHEST,
        preferred_element_type=jnp.float32)

    # (1, tm) row norms of x, computed via the MXU so the result is already
    # lane-major (avoids a sublane->lane relayout).
    xn_t = jax.lax.dot_general(
        jnp.ones((1, x.shape[1]), jnp.float32), x * x,
        dimension_numbers=(((1,), (1,)), ((), ())),
        precision=jax.lax.Precision.HIGHEST,
        preferred_element_type=jnp.float32)

    dist = jnp.abs(xn_t - 2.0 * xc_t + cn)                 # (K, tm)

    # argmin along clusters (sublane axis) with first-occurrence tie-breaking.
    min_val = jnp.min(dist, axis=0, keepdims=True)         # (1, tm)
    k = dist.shape[0]
    ids_f = jax.lax.broadcasted_iota(jnp.int32, dist.shape, 0).astype(jnp.float32)
    matched = jnp.where(dist == min_val, ids_f, jnp.float32(k))
    o_ref[...] = jnp.min(matched, axis=0, keepdims=True).astype(jnp.int32)


def _round_up(n, m):
    return ((n + m - 1) // m) * m


@functools.partial(jax.jit, static_argnames=("block_rows",))
def kmeans_assign(x, centers, centers_norm, *, block_rows=None):
    """Pallas K-Means cluster assignment.

    Args:
        x:            (*, n_features) float array (f32 or bf16).
        centers:      (n_clusters, n_features) float array.
        centers_norm: (n_clusters,) float array, == (centers ** 2).sum(-1).

    Returns:
        int32 array of shape (*,) with the nearest-cluster index per row.
    """
    *batch_dims, n_features = x.shape
    n_clusters = centers.shape[0]

    # Keep the incoming dtype: bf16 inputs are DMA'd as bf16 (half the HBM
    # traffic); the kernel accumulates in f32.
    x2 = x.reshape(-1, n_features)
    n_rows = x2.shape[0]

    if block_rows is None:
        # Mem-bound kernel: biggest row tile (multiple of 128 for lane-dense
        # output) whose double-buffered x slab stays a few MiB, well under the
        # scoped VMEM limit on every generation (incl. v7x's 64 MiB physical).
        dtype_bytes = x2.dtype.itemsize
        budget = 4 * 1024 * 1024
        br = budget // max(1, n_features * dtype_bytes)
        block_rows = max(128, min(2048, int(br)))
    # Never tile wider than the (128-aligned) problem itself.
    block_rows = min(block_rows, _round_up(n_rows, 128))
    block_rows = max(128, (block_rows // 128) * 128)

    n_padded = _round_up(n_rows, block_rows)
    if n_padded != n_rows:
        x2 = jnp.pad(x2, ((0, n_padded - n_rows), (0, 0)))

    c = jnp.asarray(centers, jnp.float32)                                # (K, F)
    cn = jnp.asarray(centers_norm, jnp.float32).reshape(n_clusters, 1)   # (K, 1)

    grid = (n_padded // block_rows,)

    cost = pl.CostEstimate(
        flops=2 * n_padded * n_features * (n_clusters + 1),
        transcendentals=0,
        bytes_accessed=(x2.size * x2.dtype.itemsize
                        + c.size * 4 + cn.size * 4 + n_padded * 4),
    )

    out = pl.pallas_call(
        _kmeans_kernel,
        out_shape=jax.ShapeDtypeStruct((1, n_padded), jnp.int32),
        grid_spec=pltpu.PrefetchScalarGridSpec(
            num_scalar_prefetch=0,
            grid=grid,
            in_specs=[
                pl.BlockSpec((block_rows, n_features), lambda i: (i, 0)),
                pl.BlockSpec((n_clusters, n_features), lambda i: (0, 0)),
                pl.BlockSpec((n_clusters, 1), lambda i: (0, 0)),
            ],
            out_specs=pl.BlockSpec((1, block_rows), lambda i: (0, i)),
        ),
        compiler_params=pltpu.CompilerParams(
            dimension_semantics=("parallel",),
            vmem_limit_bytes=32 * 1024 * 1024,
        ),
        cost_estimate=cost,
    )(x2, c, cn)

    out = out[0, :n_rows]
    return out.reshape(tuple(batch_dims))


class KMeansPallas:
    """Mirror of mlfab.nn.kmeans.KMeans using the Pallas kernel."""

    def __init__(self, centers):
        centers = jnp.asarray(centers, jnp.float32)
        self.n_clusters, self.n_features = centers.shape
        self.centers = centers
        self.centers_norm = jnp.sum(centers**2, axis=-1)

    def __call__(self, x):
        return kmeans_assign(x, self.centers, self.centers_norm)


if __name__ == "__main__":
    key = jax.random.PRNGKey(0)
    k_centers, k_x = jax.random.split(key)

    n_clusters, n_features = 16, 32
    batch, seq = 2, 8  # x: (2, 8, 32) -> ids: (2, 8)

    centers = jax.random.normal(k_centers, (n_clusters, n_features), jnp.float32)
    x = jax.random.normal(k_x, (batch, seq, n_features), jnp.float32)

    module = KMeansPallas(centers)
    ids = module(x)
    jax.block_until_ready(ids)

    # Pure-JAX reference of the PyTorch _vanilla_kmeans for a sanity check.
    x_norm = jnp.sum(x**2, axis=-1)
    xc = jnp.einsum("bsf,kf->bsk", x, module.centers,
                    precision=jax.lax.Precision.HIGHEST)
    dist = x_norm[..., None] - 2.0 * xc + module.centers_norm
    ref = jnp.argmin(jnp.abs(dist), axis=-1).astype(jnp.int32)

    assert ids.shape == (batch, seq), ids.shape
    assert ids.dtype == jnp.int32, ids.dtype
    assert bool(jnp.all(ids == ref)), "mismatch vs reference"
    print("KERNEL_OK")
</pallas_src>

<mosaic_0001>
module attributes {stable_mosaic.version = 11 : i64} {
  func.func @_kmeans_kernel(%arg0: i32, %arg1: memref<128x32xf32, #tpu.memory_space<vmem>>, %arg2: memref<16x32xf32, #tpu.memory_space<vmem>>, %arg3: memref<16x1xf32, #tpu.memory_space<vmem>>, %arg4: memref<1x128xi32, #tpu.memory_space<vmem>>) attributes {dimension_semantics = [#tpu.dimension_semantics<parallel>], iteration_bounds = array<i64: 1>, scalar_prefetch = 0 : i64, scratch_operands = 0 : i64, tpu.core_type = #tpu.core_type<tc>, window_params = [{transform_indices = @transform_0, window_bounds = array<i64: 128, 32>}, {pipeline_mode = #tpu.pipeline_mode<synchronous>, transform_indices = @transform_1, window_bounds = array<i64: 16, 32>}, {pipeline_mode = #tpu.pipeline_mode<synchronous>, transform_indices = @transform_2, window_bounds = array<i64: 16, 1>}, {transform_indices = @transform_3, window_bounds = array<i64: 1, 128>}]} {
    %c0 = arith.constant 0 : index
    %c0_0 = arith.constant 0 : index
    %0 = vector.load %arg1[%c0, %c0_0] : memref<128x32xf32, #tpu.memory_space<vmem>>, vector<128x32xf32>
    %c0_1 = arith.constant 0 : index
    %c0_2 = arith.constant 0 : index
    %1 = vector.load %arg2[%c0_1, %c0_2] : memref<16x32xf32, #tpu.memory_space<vmem>>, vector<16x32xf32>
    %c0_3 = arith.constant 0 : index
    %c0_4 = arith.constant 0 : index
    %2 = vector.load %arg3[%c0_3, %c0_4] : memref<16x1xf32, #tpu.memory_space<vmem>>, vector<16x1xf32>
    %cst = arith.constant dense<0.000000e+00> : vector<16x128xf32>
    %3 = tpu.matmul %1, %0, %cst {dimension_numbers = #tpu.dot_dimension_numbers<[1], [1], [0], [0], [0, 0, 1, 0], [], []>, precision = #tpu.contract_precision<fp32>} : vector<16x32xf32>, vector<128x32xf32>, vector<16x128xf32> -> vector<16x128xf32>
    %cst_5 = arith.constant 1.000000e+00 : f32
    %4 = vector.broadcast %cst_5 : f32 to vector<1x32xf32>
    %5 = arith.mulf %0, %0 : vector<128x32xf32>
    %cst_6 = arith.constant dense<0.000000e+00> : vector<1x128xf32>
    %6 = tpu.matmul %4, %5, %cst_6 {dimension_numbers = #tpu.dot_dimension_numbers<[1], [1], [0], [0], [0, 0, 1, 0], [], []>, precision = #tpu.contract_precision<fp32>} : vector<1x32xf32>, vector<128x32xf32>, vector<1x128xf32> -> vector<1x128xf32>
    %cst_7 = arith.constant 2.000000e+00 : f32
    %7 = vector.broadcast %cst_7 : f32 to vector<16x128xf32>
    %8 = arith.mulf %7, %3 : vector<16x128xf32>
    %9 = vector.broadcast %6 : vector<1x128xf32> to vector<16x128xf32>
    %10 = arith.subf %9, %8 : vector<16x128xf32>
    %11 = vector.broadcast %2 : vector<16x1xf32> to vector<16x128xf32>
    %12 = arith.addf %10, %11 : vector<16x128xf32>
    %13 = math.absf %12 : vector<16x128xf32>
    %cst_8 = arith.constant dense<0x7F800000> : vector<128xf32>
    %14 = vector.multi_reduction <minimumf>, %13, %cst_8 [0] : vector<16x128xf32> to vector<128xf32>
    %15 = vector.shape_cast %14 : vector<128xf32> to vector<1x128xf32>
    %16 = tpu.iota {dimensions = array<i32: 0>} : vector<16x128xi32>
    %17 = arith.sitofp %16 : vector<16x128xi32> to vector<16x128xf32>
    %18 = vector.broadcast %15 : vector<1x128xf32> to vector<16x128xf32>
    %19 = arith.cmpf oeq, %13, %18 : vector<16x128xf32>
    %cst_9 = arith.constant 1.600000e+01 : f32
    %20 = vector.broadcast %cst_9 : f32 to vector<16x128xf32>
    %21 = arith.select %19, %17, %20 : vector<16x128xi1>, vector<16x128xf32>
    %cst_10 = arith.constant dense<0x7F800000> : vector<128xf32>
    %22 = vector.multi_reduction <minimumf>, %21, %cst_10 [0] : vector<16x128xf32> to vector<128xf32>
    %23 = vector.shape_cast %22 : vector<128xf32> to vector<1x128xf32>
    %24 = arith.fptosi %23 : vector<1x128xf32> to vector<1x128xi32>
    %c0_11 = arith.constant 0 : index
    %c0_12 = arith.constant 0 : index
    %25 = vector.load %arg4[%c0_11, %c0_12] : memref<1x128xi32, #tpu.memory_space<vmem>>, vector<1x128xi32>
    tpu.vector_store %arg4[%c0_11, %c0_12], %24 {strides = array<i32>} : memref<1x128xi32, #tpu.memory_space<vmem>>, vector<1x128xi32>,
    return
  }
  func.func @transform_0(%arg0: i32) -> (i32, i32) {
    %c0_i32 = arith.constant 0 : i32
    %c0_i32_0 = arith.constant 0 : i32
    return %arg0, %c0_i32 : i32, i32
  }
  func.func @transform_1(%arg0: i32) -> (i32, i32) {
    %c0_i32 = arith.constant 0 : i32
    %c0_i32_0 = arith.constant 0 : i32
    %c0_i32_1 = arith.constant 0 : i32
    return %c0_i32, %c0_i32_0 : i32, i32
  }
  func.func @transform_2(%arg0: i32) -> (i32, i32) {
    %c0_i32 = arith.constant 0 : i32
    %c0_i32_0 = arith.constant 0 : i32
    %c0_i32_1 = arith.constant 0 : i32
    return %c0_i32, %c0_i32_0 : i32, i32
  }
  func.func @transform_3(%arg0: i32) -> (i32, i32) {
    %c0_i32 = arith.constant 0 : i32
    %c0_i32_0 = arith.constant 0 : i32
    return %c0_i32, %arg0 : i32, i32
  }
}

</mosaic_0001>

<llo_original>
// kernel: squeeze.1
$region0: #{squeeze.1}
  %s0 = inlined_call_operand.vmem [shape: s32[16], index: 0, kind: input, shape index: {}]
  %s1 = inlined_call_operand.hbm [shape: s32[2,8], index: 1, kind: output, shape index: {}]
  $region1: #{squeeze.1} parent=0
    #allocation0 [shape = 'u8[1024]{0}', space=vmem, size = 0x400, scoped, tag = 'operand span for operand 1']
    #allocation1 [shape = 's32[1]{0}', space=sflag, size = 0x4, scoped, tag = 'scoped memory for squeeze.1']
    #allocation2 [shape = 'u8[4096]{0}', space=vmem, size = 0x1000, scoped, tag = 'scoped mem for output reshape']
    #allocation3 [shape = 'u8[4096]{0}', space=vmem, size = 0x1000, scoped, tag = 'scoped mem for input reshape']
    %2 = vsyncpa [#allocation1], 0
    %s4 = sshll.u32 1, 1
    %s5 = ssub.s32 %s4, 1
    %v6 = vld [vmem:[%s0] sm:%s5]
    %7 = vst [vmem:[#allocation3] sm:%s5] %v6
    %v8 = vld [vmem:[#allocation3] sm:$0x1]
    %vm9 = vcmask 64512
    %10 = vst.msk [vmem:[#allocation2] sm:$0x1] %vm9, %v8
    %v11 = vld [vmem:[#allocation3] sm:$0x1]
    %12 = vrot.lane.b32.xlu0 %v11, 120
    %v13 = vpop.permute.xlu0 %12
    %vm14 = vcmask 64512
    %s15 = scalar_lea.vmem [#allocation2], 1
    %16 = vst.msk [vmem:[%s15] sm:$0x1] %vm14, %v13
    %s18 = sshll.u32 1, 2
    %s19 = ssub.s32 %s18, 1
    %v21 = vld [vmem:[#allocation2] sm:%s19]
    %s22 = sshll.u32 1, 2
    %s23 = ssub.s32 %s22, 1
    %24 = vst [vmem:[#allocation0] sm:%s23] %v21
    %s26 = ssub.s32 32, 32
    %27 = vsyncadd [#allocation1], %s26
    %s29 = sshll.u32 [#allocation0], 4
    %s30 = int_to_ptr.vmem [resolvable:$true] %s29
    %32 = dma.vmem_to_hbm [thread:$0]  %s30, 32, %s1, [#allocation1]
    %33 = dma.done [#allocation1], 32
    %34 = vsyncpa [#allocation1], 1

// kernel: kmeans_assign.1
$region0: #{kmeans_assign.1}
  #allocation0 [shape = 'u32[]', space=smem, size = 0x4, offset = 0x4, fixed_abs, tag = 'smem constant byte address 0x4 - core index']
  #allocation1 [shape = 'u32[144,128]{1,0:T(1,128)}', space=vmem, size = 0x12000, scoped, tag = 'internal scratch']
  %s0 = inlined_call_operand.vmem [shape: f32[128,32], index: 0, kind: input, shape index: {}]
  %s1 = inlined_call_operand.vmem [shape: f32[16,32], index: 1, kind: input, shape index: {}]
  %s2 = inlined_call_operand.vmem [shape: f32[16,1], index: 2, kind: input, shape index: {}]
  %s3 = inlined_call_operand.vmem [shape: s32[1,128], index: 3, kind: output, shape index: {}]
  %s4 = sld [smem:[#allocation0]]
  $region22: #{kmeans_assign.1} parent=0
    _
  %s6 = ssub.s32 1, %s4
  %s7 = scalar_select 0, %s6, %s4
  // Predicated region
  $region2: #{kmeans_assign.1} parent=0 // pred_check
    _
  $region3: #{kmeans_assign.1} parent=0 // pred_check_branch
    %9 = sbr.rel (0) target = $region5
  $region4: #{kmeans_assign.1} parent=0 // pred_region
    _
  $region5: #{kmeans_assign.1} parent=0 // pred_fallthru
    _
  // Predicated region
  $region6: #{kmeans_assign.1} parent=0 // pred_check
    _
  $region7: #{kmeans_assign.1} parent=0 // pred_check_branch
    %11 = sbr.rel (0) target = $region9
  $region8: #{kmeans_assign.1} parent=0 // pred_region
    _
  $region9: #{kmeans_assign.1} parent=0 // pred_fallthru
    _
  // Predicated region
  $region10: #{kmeans_assign.1} parent=0 // pred_check
    _
  $region11: #{kmeans_assign.1} parent=0 // pred_check_branch
    %13 = sbr.rel (0) target = $region13
  $region12: #{kmeans_assign.1} parent=0 // pred_region
    _
  $region13: #{kmeans_assign.1} parent=0 // pred_fallthru
    _
  %v14 = vld [vmem:[%s0] sm:$0xff]
  %v15 = vld [vmem:[%s0 + $0x8] sm:$0xff]
  %v16 = vld [vmem:[%s0 + $0x10] sm:$0xff]
  %v17 = vld [vmem:[%s0 + $0x18] sm:$0xff]
  %v18 = vld [vmem:[%s0 + $0x20] sm:$0xff]
  %v19 = vld [vmem:[%s0 + $0x28] sm:$0xff]
  %v20 = vld [vmem:[%s0 + $0x30] sm:$0xff]
  %v21 = vld [vmem:[%s0 + $0x38] sm:$0xff]
  %v22 = vld [vmem:[%s0 + $0x40] sm:$0xff]
  %v23 = vld [vmem:[%s0 + $0x48] sm:$0xff]
  %v24 = vld [vmem:[%s0 + $0x50] sm:$0xff]
  %v25 = vld [vmem:[%s0 + $0x58] sm:$0xff]
  %v26 = vld [vmem:[%s0 + $0x60] sm:$0xff]
  %v27 = vld [vmem:[%s0 + $0x68] sm:$0xff]
  %v28 = vld [vmem:[%s0 + $0x70] sm:$0xff]
  %v29 = vld [vmem:[%s0 + $0x78] sm:$0xff]
  %v30 = vld [vmem:[%s1] sm:$0xff]
  %v31 = vld [vmem:[%s1 + $0x8] sm:$0xff]
  %v32 = vld [vmem:[%s2] sm:$0xff]
  %v33 = vld [vmem:[%s2 + $0x8] sm:$0xff]
  %vm34 = vcmask 261120
  %v36 = vsel %vm34, %v30, 0
  %v39 = vsel %vm34, %v31, 0
  %v42 = vsel %vm34, %v14, 0
  %v45 = vsel %vm34, %v15, 0
  %v48 = vsel %vm34, %v16, 0
  %v51 = vsel %vm34, %v17, 0
  %v54 = vsel %vm34, %v18, 0
  %v57 = vsel %vm34, %v19, 0
  %v60 = vsel %vm34, %v20, 0
  %v63 = vsel %vm34, %v21, 0
  %v66 = vsel %vm34, %v22, 0
  %v69 = vsel %vm34, %v23, 0
  %v72 = vsel %vm34, %v24, 0
  %v75 = vsel %vm34, %v25, 0
  %v78 = vsel %vm34, %v26, 0
  %v81 = vsel %vm34, %v27, 0
  %v84 = vsel %vm34, %v28, 0
  %v87 = vsel %vm34, %v29, 0
  %89 = vmatprep.subr.mxu0 0.0
  %v90 = vand.u32 %v87, 4294901760
  %91 = vmatpush1.xpose.msra.mxu0 %v90
  %92 = vmatprep.subr.mxu0 0.0
  %v93 = vand.u32 %v84, 4294901760
  %94 = vmatpush1.xpose.msra.mxu0 %v93
  %95 = vmatprep.subr.mxu0 0.0
  %v96 = vand.u32 %v81, 4294901760
  %97 = vmatpush1.xpose.msra.mxu0 %v96
  %98 = vmatprep.subr.mxu0 0.0
  %v99 = vand.u32 %v78, 4294901760
  %100 = vmatpush1.xpose.msra.mxu0 %v99
  %101 = vmatprep.subr.mxu0 0.0
  %v102 = vand.u32 %v75, 4294901760
  %103 = vmatpush1.xpose.msra.mxu0 %v102
  %104 = vmatprep.subr.mxu0 0.0
  %v105 = vand.u32 %v72, 4294901760
  %106 = vmatpush1.xpose.msra.mxu0 %v105
  %107 = vmatprep.subr.mxu0 0.0
  %v108 = vand.u32 %v69, 4294901760
  %109 = vmatpush1.xpose.msra.mxu0 %v108
  %110 = vmatprep.subr.mxu0 0.0
  %v111 = vand.u32 %v66, 4294901760
  %112 = vmatpush1.xpose.msra.mxu0 %v111
  %113 = vmatprep.subr.mxu0 0.0
  %v114 = vand.u32 %v63, 4294901760
  %115 = vmatpush1.xpose.msra.mxu0 %v114
  %116 = vmatprep.subr.mxu0 0.0
  %v117 = vand.u32 %v60, 4294901760
  %118 = vmatpush1.xpose.msra.mxu0 %v117
  %119 = vmatprep.subr.mxu0 0.0
  %v120 = vand.u32 %v57, 4294901760
  %121 = vmatpush1.xpose.msra.mxu0 %v120
  %122 = vmatprep.subr.mxu0 0.0
  %v123 = vand.u32 %v54, 4294901760
  %124 = vmatpush1.xpose.msra.mxu0 %v123
  %125 = vmatprep.subr.mxu0 0.0
  %v126 = vand.u32 %v51, 4294901760
  %127 = vmatpush1.xpose.msra.mxu0 %v126
  %128 = vmatprep.subr.mxu0 0.0
  %v129 = vand.u32 %v48, 4294901760
  %130 = vmatpush1.xpose.msra.mxu0 %v129
  %131 = vmatprep.subr.mxu0 0.0
  %v132 = vand.u32 %v45, 4294901760
  %133 = vmatpush1.xpose.msra.mxu0 %v132
  %134 = vmatprep.subr.mxu0 0.0
  %v135 = vand.u32 %v42, 4294901760
  %136 = vmatpush1.xpose.msra.mxu0 %v135
  %137 = vmatprep.subr.mxu0 0.0
  %138 = vmatpush2.xpose.msra.mxu0 0.0
  %139 = vmatprep.subr.mxu0 0.0
  %140 = vmatpush2.xpose.msra.mxu0 0.0
  %141 = vmatprep.subr.mxu0 0.0
  %142 = vmatpush2.xpose.msra.mxu0 0.0
  %143 = vmatprep.subr.mxu0 0.0
  %144 = vmatpush2.xpose.msra.mxu0 0.0
  %145 = vmatprep.subr.mxu0 0.0
  %146 = vmatpush2.xpose.msra.mxu0 0.0
  %147 = vmatprep.subr.mxu0 0.0
  %148 = vmatpush2.xpose.msra.mxu0 0.0
  %149 = vmatprep.subr.mxu0 0.0
  %150 = vmatpush2.xpose.msra.mxu0 0.0
  %151 = vmatprep.subr.mxu0 0.0
  %152 = vmatpush2.xpose.msra.mxu0 0.0
  %153 = vmatprep.subr.mxu0 0.0
  %154 = vmatpush2.xpose.msra.mxu0 0.0
  %155 = vmatprep.subr.mxu0 0.0
  %156 = vmatpush2.xpose.msra.mxu0 0.0
  %157 = vmatprep.subr.mxu0 0.0
  %158 = vmatpush2.xpose.msra.mxu0 0.0
  %159 = vmatprep.subr.mxu0 0.0
  %160 = vmatpush2.xpose.msra.mxu0 0.0
  %161 = vmatprep.subr.mxu0 0.0
  %162 = vmatpush2.xpose.msra.mxu0 0.0
  %163 = vmatprep.subr.mxu0 0.0
  %164 = vmatpush2.xpose.msra.mxu0 0.0
  %165 = vmatprep.subr.mxu0 0.0
  %166 = vmatpush2.xpose.msra.mxu0 0.0
  %167 = vmatprep.subr.mxu0 0.0
  %168 = vmatpush2.xpose.msra.mxu0 0.0
  %169 = vmatprep.mubr.f32.mxu0 0.0
  %v170 = vand.u32 %v36, 4294901760
  %v171 = vsub.f32 %v36, %v170
  %v172 = vand.u32 %v171, 4294901760
  %v173 = vsub.f32 %v171, %v172
  %v174 = vand.u32 %v173, 4294901760
  %175 = vmatmul.mubr.f32.gmra.mxu0 %v174
  %v176 = vpop.f32.mrf.mxu0
  %v177 = vadd.f32 0.0, %v176
  %v178 = vpop.f32.mrf.mxu0
  %179 = vmatprep.mubr.f32.mxu0 0.0
  %v180 = vand.u32 %v39, 4294901760
  %v181 = vsub.f32 %v39, %v180
  %v182 = vand.u32 %v181, 4294901760
  %v183 = vsub.f32 %v181, %v182
  %v184 = vand.u32 %v183, 4294901760
  %185 = vmatmul.mubr.f32.gmra.mxu0 %v184
  %v186 = vpop.f32.mrf.mxu0
  %v187 = vadd.f32 0.0, %v186
  %v188 = vpop.f32.mrf.mxu0
  %189 = vdwg.mxu0
  %190 = vmatprep.subr.mxu0 0.0
  %v191 = vand.u32 %v87, 4294901760
  %v192 = vsub.f32 %v87, %v191
  %v193 = vand.u32 %v192, 4294901760
  %v194 = vsub.f32 %v192, %v193
  %v195 = vand.u32 %v194, 4294901760
  %196 = vmatpush1.xpose.msra.mxu0 %v195
  %197 = vmatprep.subr.mxu0 0.0
  %v198 = vand.u32 %v84, 4294901760
  %v199 = vsub.f32 %v84, %v198
  %v200 = vand.u32 %v199, 4294901760
  %v201 = vsub.f32 %v199, %v200
  %v202 = vand.u32 %v201, 4294901760
  %203 = vmatpush1.xpose.msra.mxu0 %v202
  %204 = vmatprep.subr.mxu0 0.0
  %v205 = vand.u32 %v81, 4294901760
  %v206 = vsub.f32 %v81, %v205
  %v207 = vand.u32 %v206, 4294901760
  %v208 = vsub.f32 %v206, %v207
  %v209 = vand.u32 %v208, 4294901760
  %210 = vmatpush1.xpose.msra.mxu0 %v209
  %211 = vmatprep.subr.mxu0 0.0
  %v212 = vand.u32 %v78, 4294901760
  %v213 = vsub.f32 %v78, %v212
  %v214 = vand.u32 %v213, 4294901760
  %v215 = vsub.f32 %v213, %v214
  %v216 = vand.u32 %v215, 4294901760
  %217 = vmatpush1.xpose.msra.mxu0 %v216
  %218 = vmatprep.subr.mxu0 0.0
  %v219 = vand.u32 %v75, 4294901760
  %v220 = vsub.f32 %v75, %v219
  %v221 = vand.u32 %v220, 4294901760
  %v222 = vsub.f32 %v220, %v221
  %v223 = vand.u32 %v222, 4294901760
  %224 = vmatpush1.xpose.msra.mxu0 %v223
  %225 = vmatprep.subr.mxu0 0.0
  %v226 = vand.u32 %v72, 4294901760
  %v227 = vsub.f32 %v72, %v226
  %v228 = vand.u32 %v227, 4294901760
  %v229 = vsub.f32 %v227, %v228
  %v230 = vand.u32 %v229, 4294901760
  %231 = vmatpush1.xpose.msra.mxu0 %v230
  %232 = vmatprep.subr.mxu0 0.0
  %v233 = vand.u32 %v69, 4294901760
  %v234 = vsub.f32 %v69, %v233
  %v235 = vand.u32 %v234, 4294901760
  %v236 = vsub.f32 %v234, %v235
  %v237 = vand.u32 %v236, 4294901760
  %238 = vmatpush1.xpose.msra.mxu0 %v237
  %239 = vmatprep.subr.mxu0 0.0
  %v240 = vand.u32 %v66, 4294901760
  %v241 = vsub.f32 %v66, %v240
  %v242 = vand.u32 %v241, 4294901760
  %v243 = vsub.f32 %v241, %v242
  %v244 = vand.u32 %v243, 4294901760
  %245 = vmatpush1.xpose.msra.mxu0 %v244
  %246 = vmatprep.subr.mxu0 0.0
  %v247 = vand.u32 %v63, 4294901760
  %v248 = vsub.f32 %v63, %v247
  %v249 = vand.u32 %v248, 4294901760
  %v250 = vsub.f32 %v248, %v249
  %v251 = vand.u32 %v250, 4294901760
  %252 = vmatpush1.xpose.msra.mxu0 %v251
  %253 = vmatprep.subr.mxu0 0.0
  %v254 = vand.u32 %v60, 4294901760
  %v255 = vsub.f32 %v60, %v254
  %v256 = vand.u32 %v255, 4294901760
  %v257 = vsub.f32 %v255, %v256
  %v258 = vand.u32 %v257, 4294901760
  %259 = vmatpush1.xpose.msra.mxu0 %v258
  %260 = vmatprep.subr.mxu0 0.0
  %v261 = vand.u32 %v57, 4294901760
  %v262 = vsub.f32 %v57, %v261
  %v263 = vand.u32 %v262, 4294901760
  %v264 = vsub.f32 %v262, %v263
  %v265 = vand.u32 %v264, 4294901760
  %266 = vmatpush1.xpose.msra.mxu0 %v265
  %267 = vmatprep.subr.mxu0 0.0
  %v268 = vand.u32 %v54, 4294901760
  %v269 = vsub.f32 %v54, %v268
  %v270 = vand.u32 %v269, 4294901760
  %v271 = vsub.f32 %v269, %v270
  %v272 = vand.u32 %v271, 4294901760
  %273 = vmatpush1.xpose.msra.mxu0 %v272
  %274 = vmatprep.subr.mxu0 0.0
  %v275 = vand.u32 %v51, 4294901760
  %v276 = vsub.f32 %v51, %v275
  %v277 = vand.u32 %v276, 4294901760
  %v278 = vsub.f32 %v276, %v277
  %v279 = vand.u32 %v278, 4294901760
  %280 = vmatpush1.xpose.msra.mxu0 %v279
  %281 = vmatprep.subr.mxu0 0.0
  %v282 = vand.u32 %v48, 4294901760
  %v283 = vsub.f32 %v48, %v282
  %v284 = vand.u32 %v283, 4294901760
  %v285 = vsub.f32 %v283, %v284
  %v286 = vand.u32 %v285, 4294901760
  %287 = vmatpush1.xpose.msra.mxu0 %v286
  %288 = vmatprep.subr.mxu0 0.0
  %v289 = vand.u32 %v45, 4294901760
  %v290 = vsub.f32 %v45, %v289
  %v291 = vand.u32 %v290, 4294901760
  %v292 = vsub.f32 %v290, %v291
  %v293 = vand.u32 %v292, 4294901760
  %294 = vmatpush1.xpose.msra.mxu0 %v293
  %295 = vmatprep.subr.mxu0 0.0
  %v296 = vand.u32 %v42, 4294901760
  %v297 = vsub.f32 %v42, %v296
  %v298 = vand.u32 %v297, 4294901760
  %v299 = vsub.f32 %v297, %v298
  %v300 = vand.u32 %v299, 4294901760
  %301 = vmatpush1.xpose.msra.mxu0 %v300
  %302 = vmatprep.subr.mxu0 0.0
  %303 = vmatpush2.xpose.msra.mxu0 0.0
  %304 = vmatprep.subr.mxu0 0.0
  %305 = vmatpush2.xpose.msra.mxu0 0.0
  %306 = vmatprep.subr.mxu0 0.0
  %307 = vmatpush2.xpose.msra.mxu0 0.0
  %308 = vmatprep.subr.mxu0 0.0
  %309 = vmatpush2.xpose.msra.mxu0 0.0
  %310 = vmatprep.subr.mxu0 0.0
  %311 = vmatpush2.xpose.msra.mxu0 0.0
  %312 = vmatprep.subr.mxu0 0.0
  %313 = vmatpush2.xpose.msra.mxu0 0.0
  %314 = vmatprep.subr.mxu0 0.0
  %315 = vmatpush2.xpose.msra.mxu0 0.0
  %316 = vmatprep.subr.mxu0 0.0
  %317 = vmatpush2.xpose.msra.mxu0 0.0
  %318 = vmatprep.subr.mxu0 0.0
  %319 = vmatpush2.xpose.msra.mxu0 0.0
  %320 = vmatprep.subr.mxu0 0.0
  %321 = vmatpush2.xpose.msra.mxu0 0.0
  %322 = vmatprep.subr.mxu0 0.0
  %323 = vmatpush2.xpose.msra.mxu0 0.0
  %324 = vmatprep.subr.mxu0 0.0
  %325 = vmatpush2.xpose.msra.mxu0 0.0
  %326 = vmatprep.subr.mxu0 0.0
  %327 = vmatpush2.xpose.msra.mxu0 0.0
  %328 = vmatprep.subr.mxu0 0.0
  %329 = vmatpush2.xpose.msra.mxu0 0.0
  %330 = vmatprep.subr.mxu0 0.0
  %331 = vmatpush2.xpose.msra.mxu0 0.0
  %332 = vmatprep.subr.mxu0 0.0
  %333 = vmatpush2.xpose.msra.mxu0 0.0
  %334 = vmatprep.mubr.f32.mxu0 0.0
  %v335 = vand.u32 %v36, 4294901760
  %336 = vmatmul.mubr.f32.gmra.mxu0 %v335
  %v337 = vpop.f32.mrf.mxu0
  %v338 = vadd.f32 %v177, %v337
  %v339 = vpop.f32.mrf.mxu0
  %340 = vmatprep.mubr.f32.mxu0 0.0
  %v341 = vand.u32 %v39, 4294901760
  %342 = vmatmul.mubr.f32.gmra.mxu0 %v341
  %v343 = vpop.f32.mrf.mxu0
  %v344 = vadd.f32 %v187, %v343
  %v345 = vpop.f32.mrf.mxu0
  %346 = vdwg.mxu0
  %347 = vmatprep.subr.mxu0 0.0
  %v348 = vand.u32 %v87, 4294901760
  %v349 = vsub.f32 %v87, %v348
  %350 = vmatpush1.xpose.msra.mxu0 %v349
  %351 = vmatprep.subr.mxu0 0.0
  %v352 = vand.u32 %v84, 4294901760
  %v353 = vsub.f32 %v84, %v352
  %354 = vmatpush1.xpose.msra.mxu0 %v353
  %355 = vmatprep.subr.mxu0 0.0
  %v356 = vand.u32 %v81, 4294901760
  %v357 = vsub.f32 %v81, %v356
  %358 = vmatpush1.xpose.msra.mxu0 %v357
  %359 = vmatprep.subr.mxu0 0.0
  %v360 = vand.u32 %v78, 4294901760
  %v361 = vsub.f32 %v78, %v360
  %362 = vmatpush1.xpose.msra.mxu0 %v361
  %363 = vmatprep.subr.mxu0 0.0
  %v364 = vand.u32 %v75, 4294901760
  %v365 = vsub.f32 %v75, %v364
  %366 = vmatpush1.xpose.msra.mxu0 %v365
  %367 = vmatprep.subr.mxu0 0.0
  %v368 = vand.u32 %v72, 4294901760
  %v369 = vsub.f32 %v72, %v368
  %370 = vmatpush1.xpose.msra.mxu0 %v369
  %371 = vmatprep.subr.mxu0 0.0
  %v372 = vand.u32 %v69, 4294901760
  %v373 = vsub.f32 %v69, %v372
  %374 = vmatpush1.xpose.msra.mxu0 %v373
  %375 = vmatprep.subr.mxu0 0.0
  %v376 = vand.u32 %v66, 4294901760
  %v377 = vsub.f32 %v66, %v376
  %378 = vmatpush1.xpose.msra.mxu0 %v377
  %379 = vmatprep.subr.mxu0 0.0
  %v380 = vand.u32 %v63, 4294901760
  %v381 = vsub.f32 %v63, %v380
  %382 = vmatpush1.xpose.msra.mxu0 %v381
  %383 = vmatprep.subr.mxu0 0.0
  %v384 = vand.u32 %v60, 4294901760
  %v385 = vsub.f32 %v60, %v384
  %386 = vmatpush1.xpose.msra.mxu0 %v385
  %387 = vmatprep.subr.mxu0 0.0
  %v388 = vand.u32 %v57, 4294901760
  %v389 = vsub.f32 %v57, %v388
  %390 = vmatpush1.xpose.msra.mxu0 %v389
  %391 = vmatprep.subr.mxu0 0.0
  %v392 = vand.u32 %v54, 4294901760
  %v393 = vsub.f32 %v54, %v392
  %394 = vmatpush1.xpose.msra.mxu0 %v393
  %395 = vmatprep.subr.mxu0 0.0
  %v396 = vand.u32 %v51, 4294901760
  %v397 = vsub.f32 %v51, %v396
  %398 = vmatpush1.xpose.msra.mxu0 %v397
  %399 = vmatprep.subr.mxu0 0.0
  %v400 = vand.u32 %v48, 4294901760
  %v401 = vsub.f32 %v48, %v400
  %402 = vmatpush1.xpose.msra.mxu0 %v401
  %403 = vmatprep.subr.mxu0 0.0
  %v404 = vand.u32 %v45, 4294901760
  %v405 = vsub.f32 %v45, %v404
  %406 = vmatpush1.xpose.msra.mxu0 %v405
  %407 = vmatprep.subr.mxu0 0.0
  %v408 = vand.u32 %v42, 4294901760
  %v409 = vsub.f32 %v42, %v408
  %410 = vmatpush1.xpose.msra.mxu0 %v409
  %411 = vmatprep.subr.mxu0 0.0
  %412 = vmatpush2.xpose.msra.mxu0 0.0
  %413 = vmatprep.subr.mxu0 0.0
  %414 = vmatpush2.xpose.msra.mxu0 0.0
  %415 = vmatprep.subr.mxu0 0.0
  %416 = vmatpush2.xpose.msra.mxu0 0.0
  %417 = vmatprep.subr.mxu0 0.0
  %418 = vmatpush2.xpose.msra.mxu0 0.0
  %419 = vmatprep.subr.mxu0 0.0
  %420 = vmatpush2.xpose.msra.mxu0 0.0
  %421 = vmatprep.subr.mxu0 0.0
  %422 = vmatpush2.xpose.msra.mxu0 0.0
  %423 = vmatprep.subr.mxu0 0.0
  %424 = vmatpush2.xpose.msra.mxu0 0.0
  %425 = vmatprep.subr.mxu0 0.0
  %426 = vmatpush2.xpose.msra.mxu0 0.0
  %427 = vmatprep.subr.mxu0 0.0
  %428 = vmatpush2.xpose.msra.mxu0 0.0
  %429 = vmatprep.subr.mxu0 0.0
  %430 = vmatpush2.xpose.msra.mxu0 0.0
  %431 = vmatprep.subr.mxu0 0.0
  %432 = vmatpush2.xpose.msra.mxu0 0.0
  %433 = vmatprep.subr.mxu0 0.0
  %434 = vmatpush2.xpose.msra.mxu0 0.0
  %435 = vmatprep.subr.mxu0 0.0
  %436 = vmatpush2.xpose.msra.mxu0 0.0
  %437 = vmatprep.subr.mxu0 0.0
  %438 = vmatpush2.xpose.msra.mxu0 0.0
  %439 = vmatprep.subr.mxu0 0.0
  %440 = vmatpush2.xpose.msra.mxu0 0.0
  %441 = vmatprep.subr.mxu0 0.0
  %442 = vmatpush2.xpose.msra.mxu0 0.0
  %443 = vmatprep.mubr.f32.mxu0 0.0
  %v444 = vand.u32 %v36, 4294901760
  %v445 = vsub.f32 %v36, %v444
  %446 = vmatmul.mubr.f32.gmra.mxu0 %v445
  %v447 = vpop.f32.mrf.mxu0
  %v448 = vadd.f32 %v338, %v447
  %v449 = vpop.f32.mrf.mxu0
  %450 = vmatprep.mubr.f32.mxu0 0.0
  %v451 = vand.u32 %v39, 4294901760
  %v452 = vsub.f32 %v39, %v451
  %453 = vmatmul.mubr.f32.gmra.mxu0 %v452
  %v454 = vpop.f32.mrf.mxu0
  %v455 = vadd.f32 %v344, %v454
  %v456 = vpop.f32.mrf.mxu0
  %457 = vdwg.mxu0
  %458 = vmatprep.subr.mxu0 0.0
  %v459 = vand.u32 %v87, 4294901760
  %460 = vmatpush1.xpose.msra.mxu0 %v459
  %461 = vmatprep.subr.mxu0 0.0
  %v462 = vand.u32 %v84, 4294901760
  %463 = vmatpush1.xpose.msra.mxu0 %v462
  %464 = vmatprep.subr.mxu0 0.0
  %v465 = vand.u32 %v81, 4294901760
  %466 = vmatpush1.xpose.msra.mxu0 %v465
  %467 = vmatprep.subr.mxu0 0.0
  %v468 = vand.u32 %v78, 4294901760
  %469 = vmatpush1.xpose.msra.mxu0 %v468
  %470 = vmatprep.subr.mxu0 0.0
  %v471 = vand.u32 %v75, 4294901760
  %472 = vmatpush1.xpose.msra.mxu0 %v471
  %473 = vmatprep.subr.mxu0 0.0
  %v474 = vand.u32 %v72, 4294901760
  %475 = vmatpush1.xpose.msra.mxu0 %v474
  %476 = vmatprep.subr.mxu0 0.0
  %v477 = vand.u32 %v69, 4294901760
  %478 = vmatpush1.xpose.msra.mxu0 %v477
  %479 = vmatprep.subr.mxu0 0.0
  %v480 = vand.u32 %v66, 4294901760
  %481 = vmatpush1.xpose.msra.mxu0 %v480
  %482 = vmatprep.subr.mxu0 0.0
  %v483 = vand.u32 %v63, 4294901760
  %484 = vmatpush1.xpose.msra.mxu0 %v483
  %485 = vmatprep.subr.mxu0 0.0
  %v486 = vand.u32 %v60, 4294901760
  %487 = vmatpush1.xpose.msra.mxu0 %v486
  %488 = vmatprep.subr.mxu0 0.0
  %v489 = vand.u32 %v57, 4294901760
  %490 = vmatpush1.xpose.msra.mxu0 %v489
  %491 = vmatprep.subr.mxu0 0.0
  %v492 = vand.u32 %v54, 4294901760
  %493 = vmatpush1.xpose.msra.mxu0 %v492
  %494 = vmatprep.subr.mxu0 0.0
  %v495 = vand.u32 %v51, 4294901760
  %496 = vmatpush1.xpose.msra.mxu0 %v495
  %497 = vmatprep.subr.mxu0 0.0
  %v498 = vand.u32 %v48, 4294901760
  %499 = vmatpush1.xpose.msra.mxu0 %v498
  %500 = vmatprep.subr.mxu0 0.0
  %v501 = vand.u32 %v45, 4294901760
  %502 = vmatpush1.xpose.msra.mxu0 %v501
  %503 = vmatprep.subr.mxu0 0.0
  %v504 = vand.u32 %v42, 4294901760
  %505 = vmatpush1.xpose.msra.mxu0 %v504
  %506 = vmatprep.subr.mxu0 0.0
  %507 = vmatpush2.xpose.msra.mxu0 0.0
  %508 = vmatprep.subr.mxu0 0.0
  %509 = vmatpush2.xpose.msra.mxu0 0.0
  %510 = vmatprep.subr.mxu0 0.0
  %511 = vmatpush2.xpose.msra.mxu0 0.0
  %512 = vmatprep.subr.mxu0 0.0
  %513 = vmatpush2.xpose.msra.mxu0 0.0
  %514 = vmatprep.subr.mxu0 0.0
  %515 = vmatpush2.xpose.msra.mxu0 0.0
  %516 = vmatprep.subr.mxu0 0.0
  %517 = vmatpush2.xpose.msra.mxu0 0.0
  %518 = vmatprep.subr.mxu0 0.0
  %519 = vmatpush2.xpose.msra.mxu0 0.0
  %520 = vmatprep.subr.mxu0 0.0
  %521 = vmatpush2.xpose.msra.mxu0 0.0
  %522 = vmatprep.subr.mxu0 0.0
  %523 = vmatpush2.xpose.msra.mxu0 0.0
  %524 = vmatprep.subr.mxu0 0.0
  %525 = vmatpush2.xpose.msra.mxu0 0.0
  %526 = vmatprep.subr.mxu0 0.0
  %527 = vmatpush2.xpose.msra.mxu0 0.0
  %528 = vmatprep.subr.mxu0 0.0
  %529 = vmatpush2.xpose.msra.mxu0 0.0
  %530 = vmatprep.subr.mxu0 0.0
  %531 = vmatpush2.xpose.msra.mxu0 0.0
  %532 = vmatprep.subr.mxu0 0.0
  %533 = vmatpush2.xpose.msra.mxu0 0.0
  %534 = vmatprep.subr.mxu0 0.0
  %535 = vmatpush2.xpose.msra.mxu0 0.0
  %536 = vmatprep.subr.mxu0 0.0
  %537 = vmatpush2.xpose.msra.mxu0 0.0
  %538 = vmatprep.mubr.f32.mxu0 0.0
  %v539 = vand.u32 %v36, 4294901760
  %v540 = vsub.f32 %v36, %v539
  %v541 = vand.u32 %v540, 4294901760
  %542 = vmatmul.mubr.f32.gmra.mxu0 %v541
  %v543 = vpop.f32.mrf.mxu0
  %v544 = vadd.f32 %v448, %v543
  %v545 = vpop.f32.mrf.mxu0
  %546 = vmatprep.mubr.f32.mxu0 0.0
  %v547 = vand.u32 %v39, 4294901760
  %v548 = vsub.f32 %v39, %v547
  %v549 = vand.u32 %v548, 4294901760
  %550 = vmatmul.mubr.f32.gmra.mxu0 %v549
  %v551 = vpop.f32.mrf.mxu0
  %v552 = vadd.f32 %v455, %v551
  %v553 = vpop.f32.mrf.mxu0
  %554 = vdwg.mxu0
  %555 = vmatprep.subr.mxu0 0.0
  %v556 = vand.u32 %v87, 4294901760
  %v557 = vsub.f32 %v87, %v556
  %v558 = vand.u32 %v557, 4294901760
  %559 = vmatpush1.xpose.msra.mxu0 %v558
  %560 = vmatprep.subr.mxu0 0.0
  %v561 = vand.u32 %v84, 4294901760
  %v562 = vsub.f32 %v84, %v561
  %v563 = vand.u32 %v562, 4294901760
  %564 = vmatpush1.xpose.msra.mxu0 %v563
  %565 = vmatprep.subr.mxu0 0.0
  %v566 = vand.u32 %v81, 4294901760
  %v567 = vsub.f32 %v81, %v566
  %v568 = vand.u32 %v567, 4294901760
  %569 = vmatpush1.xpose.msra.mxu0 %v568
  %570 = vmatprep.subr.mxu0 0.0
  %v571 = vand.u32 %v78, 4294901760
  %v572 = vsub.f32 %v78, %v571
  %v573 = vand.u32 %v572, 4294901760
  %574 = vmatpush1.xpose.msra.mxu0 %v573
  %575 = vmatprep.subr.mxu0 0.0
  %v576 = vand.u32 %v75, 4294901760
  %v577 = vsub.f32 %v75, %v576
  %v578 = vand.u32 %v577, 4294901760
  %579 = vmatpush1.xpose.msra.mxu0 %v578
  %580 = vmatprep.subr.mxu0 0.0
  %v581 = vand.u32 %v72, 4294901760
  %v582 = vsub.f32 %v72, %v581
  %v583 = vand.u32 %v582, 4294901760
  %584 = vmatpush1.xpose.msra.mxu0 %v583
  %585 = vmatprep.subr.mxu0 0.0
  %v586 = vand.u32 %v69, 4294901760
  %v587 = vsub.f32 %v69, %v586
  %v588 = vand.u32 %v587, 4294901760
  %589 = vmatpush1.xpose.msra.mxu0 %v588
  %590 = vmatprep.subr.mxu0 0.0
  %v591 = vand.u32 %v66, 4294901760
  %v592 = vsub.f32 %v66, %v591
  %v593 = vand.u32 %v592, 4294901760
  %594 = vmatpush1.xpose.msra.mxu0 %v593
  %595 = vmatprep.subr.mxu0 0.0
  %v596 = vand.u32 %v63, 4294901760
  %v597 = vsub.f32 %v63, %v596
  %v598 = vand.u32 %v597, 4294901760
  %599 = vmatpush1.xpose.msra.mxu0 %v598
  %600 = vmatprep.subr.mxu0 0.0
  %v601 = vand.u32 %v60, 4294901760
  %v602 = vsub.f32 %v60, %v601
  %v603 = vand.u32 %v602, 4294901760
  %604 = vmatpush1.xpose.msra.mxu0 %v603
  %605 = vmatprep.subr.mxu0 0.0
  %v606 = vand.u32 %v57, 4294901760
  %v607 = vsub.f32 %v57, %v606
  %v608 = vand.u32 %v607, 4294901760
  %609 = vmatpush1.xpose.msra.mxu0 %v608
  %610 = vmatprep.subr.mxu0 0.0
  %v611 = vand.u32 %v54, 4294901760
  %v612 = vsub.f32 %v54, %v611
  %v613 = vand.u32 %v612, 4294901760
  %614 = vmatpush1.xpose.msra.mxu0 %v613
  %615 = vmatprep.subr.mxu0 0.0
  %v616 = vand.u32 %v51, 4294901760
  %v617 = vsub.f32 %v51, %v616
  %v618 = vand.u32 %v617, 4294901760
  %619 = vmatpush1.xpose.msra.mxu0 %v618
  %620 = vmatprep.subr.mxu0 0.0
  %v621 = vand.u32 %v48, 4294901760
  %v622 = vsub.f32 %v48, %v621
  %v623 = vand.u32 %v622, 4294901760
  %624 = vmatpush1.xpose.msra.mxu0 %v623
  %625 = vmatprep.subr.mxu0 0.0
  %v626 = vand.u32 %v45, 4294901760
  %v627 = vsub.f32 %v45, %v626
  %v628 = vand.u32 %v627, 4294901760
  %629 = vmatpush1.xpose.msra.mxu0 %v628
  %630 = vmatprep.subr.mxu0 0.0
  %v631 = vand.u32 %v42, 4294901760
  %v632 = vsub.f32 %v42, %v631
  %v633 = vand.u32 %v632, 4294901760
  %634 = vmatpush1.xpose.msra.mxu0 %v633
  %635 = vmatprep.subr.mxu0 0.0
  %636 = vmatpush2.xpose.msra.mxu0 0.0
  %637 = vmatprep.subr.mxu0 0.0
  %638 = vmatpush2.xpose.msra.mxu0 0.0
  %639 = vmatprep.subr.mxu0 0.0
  %640 = vmatpush2.xpose.msra.mxu0 0.0
  %641 = vmatprep.subr.mxu0 0.0
  %642 = vmatpush2.xpose.msra.mxu0 0.0
  %643 = vmatprep.subr.mxu0 0.0
  %644 = vmatpush2.xpose.msra.mxu0 0.0
  %645 = vmatprep.subr.mxu0 0.0
  %646 = vmatpush2.xpose.msra.mxu0 0.0
  %647 = vmatprep.subr.mxu0 0.0
  %648 = vmatpush2.xpose.msra.mxu0 0.0
  %649 = vmatprep.subr.mxu0 0.0
  %650 = vmatpush2.xpose.msra.mxu0 0.0
  %651 = vmatprep.subr.mxu0 0.0
  %652 = vmatpush2.xpose.msra.mxu0 0.0
  %653 = vmatprep.subr.mxu0 0.0
  %654 = vmatpush2.xpose.msra.mxu0 0.0
  %655 = vmatprep.subr.mxu0 0.0
  %656 = vmatpush2.xpose.msra.mxu0 0.0
  %657 = vmatprep.subr.mxu0 0.0
  %658 = vmatpush2.xpose.msra.mxu0 0.0
  %659 = vmatprep.subr.mxu0 0.0
  %660 = vmatpush2.xpose.msra.mxu0 0.0
  %661 = vmatprep.subr.mxu0 0.0
  %662 = vmatpush2.xpose.msra.mxu0 0.0
  %663 = vmatprep.subr.mxu0 0.0
  %664 = vmatpush2.xpose.msra.mxu0 0.0
  %665 = vmatprep.subr.mxu0 0.0
  %666 = vmatpush2.xpose.msra.mxu0 0.0
  %667 = vmatprep.mubr.f32.mxu0 0.0
  %v668 = vand.u32 %v36, 4294901760
  %669 = vmatmul.mubr.f32.gmra.mxu0 %v668
  %v670 = vpop.f32.mrf.mxu0
  %v671 = vadd.f32 %v544, %v670
  %v672 = vpop.f32.mrf.mxu0
  %673 = vmatprep.mubr.f32.mxu0 0.0
  %v674 = vand.u32 %v39, 4294901760
  %675 = vmatmul.mubr.f32.gmra.mxu0 %v674
  %v676 = vpop.f32.mrf.mxu0
  %v677 = vadd.f32 %v552, %v676
  %v678 = vpop.f32.mrf.mxu0
  %679 = vdwg.mxu0
  %680 = vmatprep.subr.mxu0 0.0
  %v681 = vand.u32 %v87, 4294901760
  %682 = vmatpush1.xpose.msra.mxu0 %v681
  %683 = vmatprep.subr.mxu0 0.0
  %v684 = vand.u32 %v84, 4294901760
  %685 = vmatpush1.xpose.msra.mxu0 %v684
  %686 = vmatprep.subr.mxu0 0.0
  %v687 = vand.u32 %v81, 4294901760
  %688 = vmatpush1.xpose.msra.mxu0 %v687
  %689 = vmatprep.subr.mxu0 0.0
  %v690 = vand.u32 %v78, 4294901760
  %691 = vmatpush1.xpose.msra.mxu0 %v690
  %692 = vmatprep.subr.mxu0 0.0
  %v693 = vand.u32 %v75, 4294901760
  %694 = vmatpush1.xpose.msra.mxu0 %v693
  %695 = vmatprep.subr.mxu0 0.0
  %v696 = vand.u32 %v72, 4294901760
  %697 = vmatpush1.xpose.msra.mxu0 %v696
  %698 = vmatprep.subr.mxu0 0.0
  %v699 = vand.u32 %v69, 4294901760
  %700 = vmatpush1.xpose.msra.mxu0 %v699
  %701 = vmatprep.subr.mxu0 0.0
  %v702 = vand.u32 %v66, 4294901760
  %703 = vmatpush1.xpose.msra.mxu0 %v702
  %704 = vmatprep.subr.mxu0 0.0
  %v705 = vand.u32 %v63, 4294901760
  %706 = vmatpush1.xpose.msra.mxu0 %v705
  %707 = vmatprep.subr.mxu0 0.0
  %v708 = vand.u32 %v60, 4294901760
  %709 = vmatpush1.xpose.msra.mxu0 %v708
  %710 = vmatprep.subr.mxu0 0.0
  %v711 = vand.u32 %v57, 4294901760
  %712 = vmatpush1.xpose.msra.mxu0 %v711
  %713 = vmatprep.subr.mxu0 0.0
  %v714 = vand.u32 %v54, 4294901760
  %715 = vmatpush1.xpose.msra.mxu0 %v714
  %716 = vmatprep.subr.mxu0 0.0
  %v717 = vand.u32 %v51, 4294901760
  %718 = vmatpush1.xpose.msra.mxu0 %v717
  %719 = vmatprep.subr.mxu0 0.0
  %v720 = vand.u32 %v48, 4294901760
  %721 = vmatpush1.xpose.msra.mxu0 %v720
  %722 = vmatprep.subr.mxu0 0.0
  %v723 = vand.u32 %v45, 4294901760
  %724 = vmatpush1.xpose.msra.mxu0 %v723
  %725 = vmatprep.subr.mxu0 0.0
  %v726 = vand.u32 %v42, 4294901760
  %727 = vmatpush1.xpose.msra.mxu0 %v726
  %728 = vmatprep.subr.mxu0 0.0
  %729 = vmatpush2.xpose.msra.mxu0 0.0
  %730 = vmatprep.subr.mxu0 0.0
  %731 = vmatpush2.xpose.msra.mxu0 0.0
  %732 = vmatprep.subr.mxu0 0.0
  %733 = vmatpush2.xpose.msra.mxu0 0.0
  %734 = vmatprep.subr.mxu0 0.0
  %735 = vmatpush2.xpose.msra.mxu0 0.0
  %736 = vmatprep.subr.mxu0 0.0
  %737 = vmatpush2.xpose.msra.mxu0 0.0
  %738 = vmatprep.subr.mxu0 0.0
  %739 = vmatpush2.xpose.msra.mxu0 0.0
  %740 = vmatprep.subr.mxu0 0.0
  %741 = vmatpush2.xpose.msra.mxu0 0.0
  %742 = vmatprep.subr.mxu0 0.0
  %743 = vmatpush2.xpose.msra.mxu0 0.0
  %744 = vmatprep.subr.mxu0 0.0
  %745 = vmatpush2.xpose.msra.mxu0 0.0
  %746 = vmatprep.subr.mxu0 0.0
  %747 = vmatpush2.xpose.msra.mxu0 0.0
  %748 = vmatprep.subr.mxu0 0.0
  %749 = vmatpush2.xpose.msra.mxu0 0.0
  %750 = vmatprep.subr.mxu0 0.0
  %751 = vmatpush2.xpose.msra.mxu0 0.0
  %752 = vmatprep.subr.mxu0 0.0
  %753 = vmatpush2.xpose.msra.mxu0 0.0
  %754 = vmatprep.subr.mxu0 0.0
  %755 = vmatpush2.xpose.msra.mxu0 0.0
  %756 = vmatprep.subr.mxu0 0.0
  %757 = vmatpush2.xpose.msra.mxu0 0.0
  %758 = vmatprep.subr.mxu0 0.0
  %759 = vmatpush2.xpose.msra.mxu0 0.0
  %760 = vmatprep.mubr.f32.mxu0 0.0
  %v761 = vand.u32 %v36, 4294901760
  %762 = vmatmul.mubr.f32.gmra.mxu0 %v761
  %v763 = vpop.f32.mrf.mxu0
  %v764 = vadd.f32 %v671, %v763
  %v765 = vpop.f32.mrf.mxu0
  %766 = vmatprep.mubr.f32.mxu0 0.0
  %v767 = vand.u32 %v39, 4294901760
  %768 = vmatmul.mubr.f32.gmra.mxu0 %v767
  %v769 = vpop.f32.mrf.mxu0
  %v770 = vadd.f32 %v677, %v769
  %v771 = vpop.f32.mrf.mxu0
  %772 = vdwg.mxu0
  %v773 = vmul.f32 %v14, %v14
  %v774 = vmul.f32 %v15, %v15
  %v775 = vmul.f32 %v16, %v16
  %v776 = vmul.f32 %v17, %v17
  %v777 = vmul.f32 %v18, %v18
  %v778 = vmul.f32 %v19, %v19
  %v779 = vmul.f32 %v20, %v20
  %v780 = vmul.f32 %v21, %v21
  %v781 = vmul.f32 %v22, %v22
  %v782 = vmul.f32 %v23, %v23
  %v783 = vmul.f32 %v24, %v24
  %v784 = vmul.f32 %v25, %v25
  %v785 = vmul.f32 %v26, %v26
  %v786 = vmul.f32 %v27, %v27
  %v787 = vmul.f32 %v28, %v28
  %v788 = vmul.f32 %v29, %v29
  %v790 = vsel %vm34, 1.0, 0
  %v793 = vsel %vm34, %v773, 0
  %v796 = vsel %vm34, %v774, 0
  %v799 = vsel %vm34, %v775, 0
  %v802 = vsel %vm34, %v776, 0
  %v805 = vsel %vm34, %v777, 0
  %v808 = vsel %vm34, %v778, 0
  %v811 = vsel %vm34, %v779, 0
  %v814 = vsel %vm34, %v780, 0
  %v817 = vsel %vm34, %v781, 0
  %v820 = vsel %vm34, %v782, 0
  %v823 = vsel %vm34, %v783, 0
  %v826 = vsel %vm34, %v784, 0
  %v829 = vsel %vm34, %v785, 0
  %v832 = vsel %vm34, %v786, 0
  %v835 = vsel %vm34, %v787, 0
  %v838 = vsel %vm34, %v788, 0
  %840 = vmatprep.subr.mxu0 0.0
  %v841 = vand.u32 %v838, 4294901760
  %842 = vmatpush1.xpose.msra.mxu0 %v841
  %843 = vmatprep.subr.mxu0 0.0
  %v844 = vand.u32 %v835, 4294901760
  %845 = vmatpush1.xpose.msra.mxu0 %v844
  %846 = vmatprep.subr.mxu0 0.0
  %v847 = vand.u32 %v832, 4294901760
  %848 = vmatpush1.xpose.msra.mxu0 %v847
  %849 = vmatprep.subr.mxu0 0.0
  %v850 = vand.u32 %v829, 4294901760
  %851 = vmatpush1.xpose.msra.mxu0 %v850
  %852 = vmatprep.subr.mxu0 0.0
  %v853 = vand.u32 %v826, 4294901760
  %854 = vmatpush1.xpose.msra.mxu0 %v853
  %855 = vmatprep.subr.mxu0 0.0
  %v856 = vand.u32 %v823, 4294901760
  %857 = vmatpush1.xpose.msra.mxu0 %v856
  %858 = vmatprep.subr.mxu0 0.0
  %v859 = vand.u32 %v820, 4294901760
  %860 = vmatpush1.xpose.msra.mxu0 %v859
  %861 = vmatprep.subr.mxu0 0.0
  %v862 = vand.u32 %v817, 4294901760
  %863 = vmatpush1.xpose.msra.mxu0 %v862
  %864 = vmatprep.subr.mxu0 0.0
  %v865 = vand.u32 %v814, 4294901760
  %866 = vmatpush1.xpose.msra.mxu0 %v865
  %867 = vmatprep.subr.mxu0 0.0
  %v868 = vand.u32 %v811, 4294901760
  %869 = vmatpush1.xpose.msra.mxu0 %v868
  %870 = vmatprep.subr.mxu0 0.0
  %v871 = vand.u32 %v808, 4294901760
  %872 = vmatpush1.xpose.msra.mxu0 %v871
  %873 = vmatprep.subr.mxu0 0.0
  %v874 = vand.u32 %v805, 4294901760
  %875 = vmatpush1.xpose.msra.mxu0 %v874
  %876 = vmatprep.subr.mxu0 0.0
  %v877 = vand.u32 %v802, 4294901760
  %878 = vmatpush1.xpose.msra.mxu0 %v877
  %879 = vmatprep.subr.mxu0 0.0
  %v880 = vand.u32 %v799, 4294901760
  %881 = vmatpush1.xpose.msra.mxu0 %v880
  %882 = vmatprep.subr.mxu0 0.0
  %v883 = vand.u32 %v796, 4294901760
  %884 = vmatpush1.xpose.msra.mxu0 %v883
  %885 = vmatprep.subr.mxu0 0.0
  %v886 = vand.u32 %v793, 4294901760
  %887 = vmatpush1.xpose.msra.mxu0 %v886
  %888 = vmatprep.subr.mxu0 0.0
  %889 = vmatpush2.xpose.msra.mxu0 0.0
  %890 = vmatprep.subr.mxu0 0.0
  %891 = vmatpush2.xpose.msra.mxu0 0.0
  %892 = vmatprep.subr.mxu0 0.0
  %893 = vmatpush2.xpose.msra.mxu0 0.0
  %894 = vmatprep.subr.mxu0 0.0
  %895 = vmatpush2.xpose.msra.mxu0 0.0
  %896 = vmatprep.subr.mxu0 0.0
  %897 = vmatpush2.xpose.msra.mxu0 0.0
  %898 = vmatprep.subr.mxu0 0.0
  %899 = vmatpush2.xpose.msra.mxu0 0.0
  %900 = vmatprep.subr.mxu0 0.0
  %901 = vmatpush2.xpose.msra.mxu0 0.0
  %902 = vmatprep.subr.mxu0 0.0
  %903 = vmatpush2.xpose.msra.mxu0 0.0
  %904 = vmatprep.subr.mxu0 0.0
  %905 = vmatpush2.xpose.msra.mxu0 0.0
  %906 = vmatprep.subr.mxu0 0.0
  %907 = vmatpush2.xpose.msra.mxu0 0.0
  %908 = vmatprep.subr.mxu0 0.0
  %909 = vmatpush2.xpose.msra.mxu0 0.0
  %910 = vmatprep.subr.mxu0 0.0
  %911 = vmatpush2.xpose.msra.mxu0 0.0
  %912 = vmatprep.subr.mxu0 0.0
  %913 = vmatpush2.xpose.msra.mxu0 0.0
  %914 = vmatprep.subr.mxu0 0.0
  %915 = vmatpush2.xpose.msra.mxu0 0.0
  %916 = vmatprep.subr.mxu0 0.0
  %917 = vmatpush2.xpose.msra.mxu0 0.0
  %918 = vmatprep.subr.mxu0 0.0
  %919 = vmatpush2.xpose.msra.mxu0 0.0
  %920 = vmatprep.mubr.f32.mxu0 0.0
  %v921 = vand.u32 %v790, 4294901760
  %v922 = vsub.f32 %v790, %v921
  %v923 = vand.u32 %v922, 4294901760
  %v924 = vsub.f32 %v922, %v923
  %v925 = vand.u32 %v924, 4294901760
  %926 = vmatmul.mubr.f32.gmra.mxu0 %v925
  %v927 = vpop.f32.mrf.mxu0
  %v928 = vadd.f32 0.0, %v927
  %v929 = vpop.f32.mrf.mxu0
  %930 = vdwg.mxu0
  %931 = vmatprep.subr.mxu0 0.0
  %v932 = vand.u32 %v838, 4294901760
  %v933 = vsub.f32 %v838, %v932
  %v934 = vand.u32 %v933, 4294901760
  %v935 = vsub.f32 %v933, %v934
  %v936 = vand.u32 %v935, 4294901760
  %937 = vmatpush1.xpose.msra.mxu0 %v936
  %938 = vmatprep.subr.mxu0 0.0
  %v939 = vand.u32 %v835, 4294901760
  %v940 = vsub.f32 %v835, %v939
  %v941 = vand.u32 %v940, 4294901760
  %v942 = vsub.f32 %v940, %v941
  %v943 = vand.u32 %v942, 4294901760
  %944 = vmatpush1.xpose.msra.mxu0 %v943
  %945 = vmatprep.subr.mxu0 0.0
  %v946 = vand.u32 %v832, 4294901760
  %v947 = vsub.f32 %v832, %v946
  %v948 = vand.u32 %v947, 4294901760
  %v949 = vsub.f32 %v947, %v948
  %v950 = vand.u32 %v949, 4294901760
  %951 = vmatpush1.xpose.msra.mxu0 %v950
  %952 = vmatprep.subr.mxu0 0.0
  %v953 = vand.u32 %v829, 4294901760
  %v954 = vsub.f32 %v829, %v953
  %v955 = vand.u32 %v954, 4294901760
  %v956 = vsub.f32 %v954, %v955
  %v957 = vand.u32 %v956, 4294901760
  %958 = vmatpush1.xpose.msra.mxu0 %v957
  %959 = vmatprep.subr.mxu0 0.0
  %v960 = vand.u32 %v826, 4294901760
  %v961 = vsub.f32 %v826, %v960
  %v962 = vand.u32 %v961, 4294901760
  %v963 = vsub.f32 %v961, %v962
  %v964 = vand.u32 %v963, 4294901760
  %965 = vmatpush1.xpose.msra.mxu0 %v964
  %966 = vmatprep.subr.mxu0 0.0
  %v967 = vand.u32 %v823, 4294901760
  %v968 = vsub.f32 %v823, %v967
  %v969 = vand.u32 %v968, 4294901760
  %v970 = vsub.f32 %v968, %v969
  %v971 = vand.u32 %v970, 4294901760
  %972 = vmatpush1.xpose.msra.mxu0 %v971
  %973 = vmatprep.subr.mxu0 0.0
  %v974 = vand.u32 %v820, 4294901760
  %v975 = vsub.f32 %v820, %v974
  %v976 = vand.u32 %v975, 4294901760
  %v977 = vsub.f32 %v975, %v976
  %v978 = vand.u32 %v977, 4294901760
  %979 = vmatpush1.xpose.msra.mxu0 %v978
  %980 = vmatprep.subr.mxu0 0.0
  %v981 = vand.u32 %v817, 4294901760
  %v982 = vsub.f32 %v817, %v981
  %v983 = vand.u32 %v982, 4294901760
  %v984 = vsub.f32 %v982, %v983
  %v985 = vand.u32 %v984, 4294901760
  %986 = vmatpush1.xpose.msra.mxu0 %v985
  %987 = vmatprep.subr.mxu0 0.0
  %v988 = vand.u32 %v814, 4294901760
  %v989 = vsub.f32 %v814, %v988
  %v990 = vand.u32 %v989, 4294901760
  %v991 = vsub.f32 %v989, %v990
  %v992 = vand.u32 %v991, 4294901760
  %993 = vmatpush1.xpose.msra.mxu0 %v992
  %994 = vmatprep.subr.mxu0 0.0
  %v995 = vand.u32 %v811, 4294901760
  %v996 = vsub.f32 %v811, %v995
  %v997 = vand.u32 %v996, 4294901760
  %v998 = vsub.f32 %v996, %v997
  %v999 = vand.u32 %v998, 4294901760
  %1000 = vmatpush1.xpose.msra.mxu0 %v999
  %1001 = vmatprep.subr.mxu0 0.0
  %v1002 = vand.u32 %v808, 4294901760
  %v1003 = vsub.f32 %v808, %v1002
  %v1004 = vand.u32 %v1003, 4294901760
  %v1005 = vsub.f32 %v1003, %v1004
  %v1006 = vand.u32 %v1005, 4294901760
  %1007 = vmatpush1.xpose.msra.mxu0 %v1006
  %1008 = vmatprep.subr.mxu0 0.0
  %v1009 = vand.u32 %v805, 4294901760
  %v1010 = vsub.f32 %v805, %v1009
  %v1011 = vand.u32 %v1010, 4294901760
  %v1012 = vsub.f32 %v1010, %v1011
  %v1013 = vand.u32 %v1012, 4294901760
  %1014 = vmatpush1.xpose.msra.mxu0 %v1013
  %1015 = vmatprep.subr.mxu0 0.0
  %v1016 = vand.u32 %v802, 4294901760
  %v1017 = vsub.f32 %v802, %v1016
  %v1018 = vand.u32 %v1017, 4294901760
  %v1019 = vsub.f32 %v1017, %v1018
  %v1020 = vand.u32 %v1019, 4294901760
  %1021 = vmatpush1.xpose.msra.mxu0 %v1020
  %1022 = vmatprep.subr.mxu0 0.0
  %v1023 = vand.u32 %v799, 4294901760
  %v1024 = vsub.f32 %v799, %v1023
  %v1025 = vand.u32 %v1024, 4294901760
  %v1026 = vsub.f32 %v1024, %v1025
  %v1027 = vand.u32 %v1026, 4294901760
  %1028 = vmatpush1.xpose.msra.mxu0 %v1027
  %1029 = vmatprep.subr.mxu0 0.0
  %v1030 = vand.u32 %v796, 4294901760
  %v1031 = vsub.f32 %v796, %v1030
  %v1032 = vand.u32 %v1031, 4294901760
  %v1033 = vsub.f32 %v1031, %v1032
  %v1034 = vand.u32 %v1033, 4294901760
  %1035 = vmatpush1.xpose.msra.mxu0 %v1034
  %1036 = vmatprep.subr.mxu0 0.0
  %v1037 = vand.u32 %v793, 4294901760
  %v1038 = vsub.f32 %v793, %v1037
  %v1039 = vand.u32 %v1038, 4294901760
  %v1040 = vsub.f32 %v1038, %v1039
  %v1041 = vand.u32 %v1040, 4294901760
  %1042 = vmatpush1.xpose.msra.mxu0 %v1041
  %1043 = vmatprep.subr.mxu0 0.0
  %1044 = vmatpush2.xpose.msra.mxu0 0.0
  %1045 = vmatprep.subr.mxu0 0.0
  %1046 = vmatpush2.xpose.msra.mxu0 0.0
  %1047 = vmatprep.subr.mxu0 0.0
  %1048 = vmatpush2.xpose.msra.mxu0 0.0
  %1049 = vmatprep.subr.mxu0 0.0
  %1050 = vmatpush2.xpose.msra.mxu0 0.0
  %1051 = vmatprep.subr.mxu0 0.0
  %1052 = vmatpush2.xpose.msra.mxu0 0.0
  %1053 = vmatprep.subr.mxu0 0.0
  %1054 = vmatpush2.xpose.msra.mxu0 0.0
  %1055 = vmatprep.subr.mxu0 0.0
  %1056 = vmatpush2.xpose.msra.mxu0 0.0
  %1057 = vmatprep.subr.mxu0 0.0
  %1058 = vmatpush2.xpose.msra.mxu0 0.0
  %1059 = vmatprep.subr.mxu0 0.0
  %1060 = vmatpush2.xpose.msra.mxu0 0.0
  %1061 = vmatprep.subr.mxu0 0.0
  %1062 = vmatpush2.xpose.msra.mxu0 0.0
  %1063 = vmatprep.subr.mxu0 0.0
  %1064 = vmatpush2.xpose.msra.mxu0 0.0
  %1065 = vmatprep.subr.mxu0 0.0
  %1066 = vmatpush2.xpose.msra.mxu0 0.0
  %1067 = vmatprep.subr.mxu0 0.0
  %1068 = vmatpush2.xpose.msra.mxu0 0.0
  %1069 = vmatprep.subr.mxu0 0.0
  %1070 = vmatpush2.xpose.msra.mxu0 0.0
  %1071 = vmatprep.subr.mxu0 0.0
  %1072 = vmatpush2.xpose.msra.mxu0 0.0
  %1073 = vmatprep.subr.mxu0 0.0
  %1074 = vmatpush2.xpose.msra.mxu0 0.0
  %1075 = vmatprep.mubr.f32.mxu0 0.0
  %v1076 = vand.u32 %v790, 4294901760
  %1077 = vmatmul.mubr.f32.gmra.mxu0 %v1076
  %v1078 = vpop.f32.mrf.mxu0
  %v1079 = vadd.f32 %v928, %v1078
  %v1080 = vpop.f32.mrf.mxu0
  %1081 = vdwg.mxu0
  %1082 = vmatprep.subr.mxu0 0.0
  %v1083 = vand.u32 %v838, 4294901760
  %v1084 = vsub.f32 %v838, %v1083
  %1085 = vmatpush1.xpose.msra.mxu0 %v1084
  %1086 = vmatprep.subr.mxu0 0.0
  %v1087 = vand.u32 %v835, 4294901760
  %v1088 = vsub.f32 %v835, %v1087
  %1089 = vmatpush1.xpose.msra.mxu0 %v1088
  %1090 = vmatprep.subr.mxu0 0.0
  %v1091 = vand.u32 %v832, 4294901760
  %v1092 = vsub.f32 %v832, %v1091
  %1093 = vmatpush1.xpose.msra.mxu0 %v1092
  %1094 = vmatprep.subr.mxu0 0.0
  %v1095 = vand.u32 %v829, 4294901760
  %v1096 = vsub.f32 %v829, %v1095
  %1097 = vmatpush1.xpose.msra.mxu0 %v1096
  %1098 = vmatprep.subr.mxu0 0.0
  %v1099 = vand.u32 %v826, 4294901760
  %v1100 = vsub.f32 %v826, %v1099
  %1101 = vmatpush1.xpose.msra.mxu0 %v1100
  %1102 = vmatprep.subr.mxu0 0.0
  %v1103 = vand.u32 %v823, 4294901760
  %v1104 = vsub.f32 %v823, %v1103
  %1105 = vmatpush1.xpose.msra.mxu0 %v1104
  %1106 = vmatprep.subr.mxu0 0.0
  %v1107 = vand.u32 %v820, 4294901760
  %v1108 = vsub.f32 %v820, %v1107
  %1109 = vmatpush1.xpose.msra.mxu0 %v1108
  %1110 = vmatprep.subr.mxu0 0.0
  %v1111 = vand.u32 %v817, 4294901760
  %v1112 = vsub.f32 %v817, %v1111
  %1113 = vmatpush1.xpose.msra.mxu0 %v1112
  %1114 = vmatprep.subr.mxu0 0.0
  %v1115 = vand.u32 %v814, 4294901760
  %v1116 = vsub.f32 %v814, %v1115
  %1117 = vmatpush1.xpose.msra.mxu0 %v1116
  %1118 = vmatprep.subr.mxu0 0.0
  %v1119 = vand.u32 %v811, 4294901760
  %v1120 = vsub.f32 %v811, %v1119
  %1121 = vmatpush1.xpose.msra.mxu0 %v1120
  %1122 = vmatprep.subr.mxu0 0.0
  %v1123 = vand.u32 %v808, 4294901760
  %v1124 = vsub.f32 %v808, %v1123
  %1125 = vmatpush1.xpose.msra.mxu0 %v1124
  %1126 = vmatprep.subr.mxu0 0.0
  %v1127 = vand.u32 %v805, 4294901760
  %v1128 = vsub.f32 %v805, %v1127
  %1129 = vmatpush1.xpose.msra.mxu0 %v1128
  %1130 = vmatprep.subr.mxu0 0.0
  %v1131 = vand.u32 %v802, 4294901760
  %v1132 = vsub.f32 %v802, %v1131
  %1133 = vmatpush1.xpose.msra.mxu0 %v1132
  %1134 = vmatprep.subr.mxu0 0.0
  %v1135 = vand.u32 %v799, 4294901760
  %v1136 = vsub.f32 %v799, %v1135
  %1137 = vmatpush1.xpose.msra.mxu0 %v1136
  %1138 = vmatprep.subr.mxu0 0.0
  %v1139 = vand.u32 %v796, 4294901760
  %v1140 = vsub.f32 %v796, %v1139
  %1141 = vmatpush1.xpose.msra.mxu0 %v1140
  %1142 = vmatprep.subr.mxu0 0.0
  %v1143 = vand.u32 %v793, 4294901760
  %v1144 = vsub.f32 %v793, %v1143
  %1145 = vmatpush1.xpose.msra.mxu0 %v1144
  %1146 = vmatprep.subr.mxu0 0.0
  %1147 = vmatpush2.xpose.msra.mxu0 0.0
  %1148 = vmatprep.subr.mxu0 0.0
  %1149 = vmatpush2.xpose.msra.mxu0 0.0
  %1150 = vmatprep.subr.mxu0 0.0
  %1151 = vmatpush2.xpose.msra.mxu0 0.0
  %1152 = vmatprep.subr.mxu0 0.0
  %1153 = vmatpush2.xpose.msra.mxu0 0.0
  %1154 = vmatprep.subr.mxu0 0.0
  %1155 = vmatpush2.xpose.msra.mxu0 0.0
  %1156 = vmatprep.subr.mxu0 0.0
  %1157 = vmatpush2.xpose.msra.mxu0 0.0
  %1158 = vmatprep.subr.mxu0 0.0
  %1159 = vmatpush2.xpose.msra.mxu0 0.0
  %1160 = vmatprep.subr.mxu0 0.0
  %1161 = vmatpush2.xpose.msra.mxu0 0.0
  %1162 = vmatprep.subr.mxu0 0.0
  %1163 = vmatpush2.xpose.msra.mxu0 0.0
  %1164 = vmatprep.subr.mxu0 0.0
  %1165 = vmatpush2.xpose.msra.mxu0 0.0
  %1166 = vmatprep.subr.mxu0 0.0
  %1167 = vmatpush2.xpose.msra.mxu0 0.0
  %1168 = vmatprep.subr.mxu0 0.0
  %1169 = vmatpush2.xpose.msra.mxu0 0.0
  %1170 = vmatprep.subr.mxu0 0.0
  %1171 = vmatpush2.xpose.msra.mxu0 0.0
  %1172 = vmatprep.subr.mxu0 0.0
  %1173 = vmatpush2.xpose.msra.mxu0 0.0
  %1174 = vmatprep.subr.mxu0 0.0
  %1175 = vmatpush2.xpose.msra.mxu0 0.0
  %1176 = vmatprep.subr.mxu0 0.0
  %1177 = vmatpush2.xpose.msra.mxu0 0.0
  %1178 = vmatprep.mubr.f32.mxu0 0.0
  %v1179 = vand.u32 %v790, 4294901760
  %v1180 = vsub.f32 %v790, %v1179
  %1181 = vmatmul.mubr.f32.gmra.mxu0 %v1180
  %v1182 = vpop.f32.mrf.mxu0
  %v1183 = vadd.f32 %v1079, %v1182
  %v1184 = vpop.f32.mrf.mxu0
  %1185 = vdwg.mxu0
  %1186 = vmatprep.subr.mxu0 0.0
  %v1187 = vand.u32 %v838, 4294901760
  %1188 = vmatpush1.xpose.msra.mxu0 %v1187
  %1189 = vmatprep.subr.mxu0 0.0
  %v1190 = vand.u32 %v835, 4294901760
  %1191 = vmatpush1.xpose.msra.mxu0 %v1190
  %1192 = vmatprep.subr.mxu0 0.0
  %v1193 = vand.u32 %v832, 4294901760
  %1194 = vmatpush1.xpose.msra.mxu0 %v1193
  %1195 = vmatprep.subr.mxu0 0.0
  %v1196 = vand.u32 %v829, 4294901760
  %1197 = vmatpush1.xpose.msra.mxu0 %v1196
  %1198 = vmatprep.subr.mxu0 0.0
  %v1199 = vand.u32 %v826, 4294901760
  %1200 = vmatpush1.xpose.msra.mxu0 %v1199
  %1201 = vmatprep.subr.mxu0 0.0
  %v1202 = vand.u32 %v823, 4294901760
  %1203 = vmatpush1.xpose.msra.mxu0 %v1202
  %1204 = vmatprep.subr.mxu0 0.0
  %v1205 = vand.u32 %v820, 4294901760
  %1206 = vmatpush1.xpose.msra.mxu0 %v1205
  %1207 = vmatprep.subr.mxu0 0.0
  %v1208 = vand.u32 %v817, 4294901760
  %1209 = vmatpush1.xpose.msra.mxu0 %v1208
  %1210 = vmatprep.subr.mxu0 0.0
  %v1211 = vand.u32 %v814, 4294901760
  %1212 = vmatpush1.xpose.msra.mxu0 %v1211
  %1213 = vmatprep.subr.mxu0 0.0
  %v1214 = vand.u32 %v811, 4294901760
  %1215 = vmatpush1.xpose.msra.mxu0 %v1214
  %1216 = vmatprep.subr.mxu0 0.0
  %v1217 = vand.u32 %v808, 4294901760
  %1218 = vmatpush1.xpose.msra.mxu0 %v1217
  %1219 = vmatprep.subr.mxu0 0.0
  %v1220 = vand.u32 %v805, 4294901760
  %1221 = vmatpush1.xpose.msra.mxu0 %v1220
  %1222 = vmatprep.subr.mxu0 0.0
  %v1223 = vand.u32 %v802, 4294901760
  %1224 = vmatpush1.xpose.msra.mxu0 %v1223
  %1225 = vmatprep.subr.mxu0 0.0
  %v1226 = vand.u32 %v799, 4294901760
  %1227 = vmatpush1.xpose.msra.mxu0 %v1226
  %1228 = vmatprep.subr.mxu0 0.0
  %v1229 = vand.u32 %v796, 4294901760
  %1230 = vmatpush1.xpose.msra.mxu0 %v1229
  %1231 = vmatprep.subr.mxu0 0.0
  %v1232 = vand.u32 %v793, 4294901760
  %1233 = vmatpush1.xpose.msra.mxu0 %v1232
  %1234 = vmatprep.subr.mxu0 0.0
  %1235 = vmatpush2.xpose.msra.mxu0 0.0
  %1236 = vmatprep.subr.mxu0 0.0
  %1237 = vmatpush2.xpose.msra.mxu0 0.0
  %1238 = vmatprep.subr.mxu0 0.0
  %1239 = vmatpush2.xpose.msra.mxu0 0.0
  %1240 = vmatprep.subr.mxu0 0.0
  %1241 = vmatpush2.xpose.msra.mxu0 0.0
  %1242 = vmatprep.subr.mxu0 0.0
  %1243 = vmatpush2.xpose.msra.mxu0 0.0
  %1244 = vmatprep.subr.mxu0 0.0
  %1245 = vmatpush2.xpose.msra.mxu0 0.0
  %1246 = vmatprep.subr.mxu0 0.0
  %1247 = vmatpush2.xpose.msra.mxu0 0.0
  %1248 = vmatprep.subr.mxu0 0.0
  %1249 = vmatpush2.xpose.msra.mxu0 0.0
  %1250 = vmatprep.subr.mxu0 0.0
  %1251 = vmatpush2.xpose.msra.mxu0 0.0
  %1252 = vmatprep.subr.mxu0 0.0
  %1253 = vmatpush2.xpose.msra.mxu0 0.0
  %1254 = vmatprep.subr.mxu0 0.0
  %1255 = vmatpush2.xpose.msra.mxu0 0.0
  %1256 = vmatprep.subr.mxu0 0.0
  %1257 = vmatpush2.xpose.msra.mxu0 0.0
  %1258 = vmatprep.subr.mxu0 0.0
  %1259 = vmatpush2.xpose.msra.mxu0 0.0
  %1260 = vmatprep.subr.mxu0 0.0
  %1261 = vmatpush2.xpose.msra.mxu0 0.0
  %1262 = vmatprep.subr.mxu0 0.0
  %1263 = vmatpush2.xpose.msra.mxu0 0.0
  %1264 = vmatprep.subr.mxu0 0.0
  %1265 = vmatpush2.xpose.msra.mxu0 0.0
  %1266 = vmatprep.mubr.f32.mxu0 0.0
  %v1267 = vand.u32 %v790, 4294901760
  %v1268 = vsub.f32 %v790, %v1267
  %v1269 = vand.u32 %v1268, 4294901760
  %1270 = vmatmul.mubr.f32.gmra.mxu0 %v1269
  %v1271 = vpop.f32.mrf.mxu0
  %v1272 = vadd.f32 %v1183, %v1271
  %v1273 = vpop.f32.mrf.mxu0
  %1274 = vdwg.mxu0
  %1275 = vmatprep.subr.mxu0 0.0
  %v1276 = vand.u32 %v838, 4294901760
  %v1277 = vsub.f32 %v838, %v1276
  %v1278 = vand.u32 %v1277, 4294901760
  %1279 = vmatpush1.xpose.msra.mxu0 %v1278
  %1280 = vmatprep.subr.mxu0 0.0
  %v1281 = vand.u32 %v835, 4294901760
  %v1282 = vsub.f32 %v835, %v1281
  %v1283 = vand.u32 %v1282, 4294901760
  %1284 = vmatpush1.xpose.msra.mxu0 %v1283
  %1285 = vmatprep.subr.mxu0 0.0
  %v1286 = vand.u32 %v832, 4294901760
  %v1287 = vsub.f32 %v832, %v1286
  %v1288 = vand.u32 %v1287, 4294901760
  %1289 = vmatpush1.xpose.msra.mxu0 %v1288
  %1290 = vmatprep.subr.mxu0 0.0
  %v1291 = vand.u32 %v829, 4294901760
  %v1292 = vsub.f32 %v829, %v1291
  %v1293 = vand.u32 %v1292, 4294901760
  %1294 = vmatpush1.xpose.msra.mxu0 %v1293
  %1295 = vmatprep.subr.mxu0 0.0
  %v1296 = vand.u32 %v826, 4294901760
  %v1297 = vsub.f32 %v826, %v1296
  %v1298 = vand.u32 %v1297, 4294901760
  %1299 = vmatpush1.xpose.msra.mxu0 %v1298
  %1300 = vmatprep.subr.mxu0 0.0
  %v1301 = vand.u32 %v823, 4294901760
  %v1302 = vsub.f32 %v823, %v1301
  %v1303 = vand.u32 %v1302, 4294901760
  %1304 = vmatpush1.xpose.msra.mxu0 %v1303
  %1305 = vmatprep.subr.mxu0 0.0
  %v1306 = vand.u32 %v820, 4294901760
  %v1307 = vsub.f32 %v820, %v1306
  %v1308 = vand.u32 %v1307, 4294901760
  %1309 = vmatpush1.xpose.msra.mxu0 %v1308
  %1310 = vmatprep.subr.mxu0 0.0
  %v1311 = vand.u32 %v817, 4294901760
  %v1312 = vsub.f32 %v817, %v1311
  %v1313 = vand.u32 %v1312, 4294901760
  %1314 = vmatpush1.xpose.msra.mxu0 %v1313
  %1315 = vmatprep.subr.mxu0 0.0
  %v1316 = vand.u32 %v814, 4294901760
  %v1317 = vsub.f32 %v814, %v1316
  %v1318 = vand.u32 %v1317, 4294901760
  %1319 = vmatpush1.xpose.msra.mxu0 %v1318
  %1320 = vmatprep.subr.mxu0 0.0
  %v1321 = vand.u32 %v811, 4294901760
  %v1322 = vsub.f32 %v811, %v1321
  %v1323 = vand.u32 %v1322, 4294901760
  %1324 = vmatpush1.xpose.msra.mxu0 %v1323
  %1325 = vmatprep.subr.mxu0 0.0
  %v1326 = vand.u32 %v808, 4294901760
  %v1327 = vsub.f32 %v808, %v1326
  %v1328 = vand.u32 %v1327, 4294901760
  %1329 = vmatpush1.xpose.msra.mxu0 %v1328
  %1330 = vmatprep.subr.mxu0 0.0
  %v1331 = vand.u32 %v805, 4294901760
  %v1332 = vsub.f32 %v805, %v1331
  %v1333 = vand.u32 %v1332, 4294901760
  %1334 = vmatpush1.xpose.msra.mxu0 %v1333
  %1335 = vmatprep.subr.mxu0 0.0
  %v1336 = vand.u32 %v802, 4294901760
  %v1337 = vsub.f32 %v802, %v1336
  %v1338 = vand.u32 %v1337, 4294901760
  %1339 = vmatpush1.xpose.msra.mxu0 %v1338
  %1340 = vmatprep.subr.mxu0 0.0
  %v1341 = vand.u32 %v799, 4294901760
  %v1342 = vsub.f32 %v799, %v1341
  %v1343 = vand.u32 %v1342, 4294901760
  %1344 = vmatpush1.xpose.msra.mxu0 %v1343
  %1345 = vmatprep.subr.mxu0 0.0
  %v1346 = vand.u32 %v796, 4294901760
  %v1347 = vsub.f32 %v796, %v1346
  %v1348 = vand.u32 %v1347, 4294901760
  %1349 = vmatpush1.xpose.msra.mxu0 %v1348
  %1350 = vmatprep.subr.mxu0 0.0
  %v1351 = vand.u32 %v793, 4294901760
  %v1352 = vsub.f32 %v793, %v1351
  %v1353 = vand.u32 %v1352, 4294901760
  %1354 = vmatpush1.xpose.msra.mxu0 %v1353
  %1355 = vmatprep.subr.mxu0 0.0
  %1356 = vmatpush2.xpose.msra.mxu0 0.0
  %1357 = vmatprep.subr.mxu0 0.0
  %1358 = vmatpush2.xpose.msra.mxu0 0.0
  %1359 = vmatprep.subr.mxu0 0.0
  %1360 = vmatpush2.xpose.msra.mxu0 0.0
  %1361 = vmatprep.subr.mxu0 0.0
  %1362 = vmatpush2.xpose.msra.mxu0 0.0
  %1363 = vmatprep.subr.mxu0 0.0
  %1364 = vmatpush2.xpose.msra.mxu0 0.0
  %1365 = vmatprep.subr.mxu0 0.0
  %1366 = vmatpush2.xpose.msra.mxu0 0.0
  %1367 = vmatprep.subr.mxu0 0.0
  %1368 = vmatpush2.xpose.msra.mxu0 0.0
  %1369 = vmatprep.subr.mxu0 0.0
  %1370 = vmatpush2.xpose.msra.mxu0 0.0
  %1371 = vmatprep.subr.mxu0 0.0
  %1372 = vmatpush2.xpose.msra.mxu0 0.0
  %1373 = vmatprep.subr.mxu0 0.0
  %1374 = vmatpush2.xpose.msra.mxu0 0.0
  %1375 = vmatprep.subr.mxu0 0.0
  %1376 = vmatpush2.xpose.msra.mxu0 0.0
  %1377 = vmatprep.subr.mxu0 0.0
  %1378 = vmatpush2.xpose.msra.mxu0 0.0
  %1379 = vmatprep.subr.mxu0 0.0
  %1380 = vmatpush2.xpose.msra.mxu0 0.0
  %1381 = vmatprep.subr.mxu0 0.0
  %1382 = vmatpush2.xpose.msra.mxu0 0.0
  %1383 = vmatprep.subr.mxu0 0.0
  %1384 = vmatpush2.xpose.msra.mxu0 0.0
  %1385 = vmatprep.subr.mxu0 0.0
  %1386 = vmatpush2.xpose.msra.mxu0 0.0
  %1387 = vmatprep.mubr.f32.mxu0 0.0
  %v1388 = vand.u32 %v790, 4294901760
  %1389 = vmatmul.mubr.f32.gmra.mxu0 %v1388
  %v1390 = vpop.f32.mrf.mxu0
  %v1391 = vadd.f32 %v1272, %v1390
  %v1392 = vpop.f32.mrf.mxu0
  %1393 = vdwg.mxu0
  %1394 = vmatprep.subr.mxu0 0.0
  %v1395 = vand.u32 %v838, 4294901760
  %1396 = vmatpush1.xpose.msra.mxu0 %v1395
  %1397 = vmatprep.subr.mxu0 0.0
  %v1398 = vand.u32 %v835, 4294901760
  %1399 = vmatpush1.xpose.msra.mxu0 %v1398
  %1400 = vmatprep.subr.mxu0 0.0
  %v1401 = vand.u32 %v832, 4294901760
  %1402 = vmatpush1.xpose.msra.mxu0 %v1401
  %1403 = vmatprep.subr.mxu0 0.0
  %v1404 = vand.u32 %v829, 4294901760
  %1405 = vmatpush1.xpose.msra.mxu0 %v1404
  %1406 = vmatprep.subr.mxu0 0.0
  %v1407 = vand.u32 %v826, 4294901760
  %1408 = vmatpush1.xpose.msra.mxu0 %v1407
  %1409 = vmatprep.subr.mxu0 0.0
  %v1410 = vand.u32 %v823, 4294901760
  %1411 = vmatpush1.xpose.msra.mxu0 %v1410
  %1412 = vmatprep.subr.mxu0 0.0
  %v1413 = vand.u32 %v820, 4294901760
  %1414 = vmatpush1.xpose.msra.mxu0 %v1413
  %1415 = vmatprep.subr.mxu0 0.0
  %v1416 = vand.u32 %v817, 4294901760
  %1417 = vmatpush1.xpose.msra.mxu0 %v1416
  %1418 = vmatprep.subr.mxu0 0.0
  %v1419 = vand.u32 %v814, 4294901760
  %1420 = vmatpush1.xpose.msra.mxu0 %v1419
  %1421 = vmatprep.subr.mxu0 0.0
  %v1422 = vand.u32 %v811, 4294901760
  %1423 = vmatpush1.xpose.msra.mxu0 %v1422
  %1424 = vmatprep.subr.mxu0 0.0
  %v1425 = vand.u32 %v808, 4294901760
  %1426 = vmatpush1.xpose.msra.mxu0 %v1425
  %1427 = vmatprep.subr.mxu0 0.0
  %v1428 = vand.u32 %v805, 4294901760
  %1429 = vmatpush1.xpose.msra.mxu0 %v1428
  %1430 = vmatprep.subr.mxu0 0.0
  %v1431 = vand.u32 %v802, 4294901760
  %1432 = vmatpush1.xpose.msra.mxu0 %v1431
  %1433 = vmatprep.subr.mxu0 0.0
  %v1434 = vand.u32 %v799, 4294901760
  %1435 = vmatpush1.xpose.msra.mxu0 %v1434
  %1436 = vmatprep.subr.mxu0 0.0
  %v1437 = vand.u32 %v796, 4294901760
  %1438 = vmatpush1.xpose.msra.mxu0 %v1437
  %1439 = vmatprep.subr.mxu0 0.0
  %v1440 = vand.u32 %v793, 4294901760
  %1441 = vmatpush1.xpose.msra.mxu0 %v1440
  %1442 = vmatprep.subr.mxu0 0.0
  %1443 = vmatpush2.xpose.msra.mxu0 0.0
  %1444 = vmatprep.subr.mxu0 0.0
  %1445 = vmatpush2.xpose.msra.mxu0 0.0
  %1446 = vmatprep.subr.mxu0 0.0
  %1447 = vmatpush2.xpose.msra.mxu0 0.0
  %1448 = vmatprep.subr.mxu0 0.0
  %1449 = vmatpush2.xpose.msra.mxu0 0.0
  %1450 = vmatprep.subr.mxu0 0.0
  %1451 = vmatpush2.xpose.msra.mxu0 0.0
  %1452 = vmatprep.subr.mxu0 0.0
  %1453 = vmatpush2.xpose.msra.mxu0 0.0
  %1454 = vmatprep.subr.mxu0 0.0
  %1455 = vmatpush2.xpose.msra.mxu0 0.0
  %1456 = vmatprep.subr.mxu0 0.0
  %1457 = vmatpush2.xpose.msra.mxu0 0.0
  %1458 = vmatprep.subr.mxu0 0.0
  %1459 = vmatpush2.xpose.msra.mxu0 0.0
  %1460 = vmatprep.subr.mxu0 0.0
  %1461 = vmatpush2.xpose.msra.mxu0 0.0
  %1462 = vmatprep.subr.mxu0 0.0
  %1463 = vmatpush2.xpose.msra.mxu0 0.0
  %1464 = vmatprep.subr.mxu0 0.0
  %1465 = vmatpush2.xpose.msra.mxu0 0.0
  %1466 = vmatprep.subr.mxu0 0.0
  %1467 = vmatpush2.xpose.msra.mxu0 0.0
  %1468 = vmatprep.subr.mxu0 0.0
  %1469 = vmatpush2.xpose.msra.mxu0 0.0
  %1470 = vmatprep.subr.mxu0 0.0
  %1471 = vmatpush2.xpose.msra.mxu0 0.0
  %1472 = vmatprep.subr.mxu0 0.0
  %1473 = vmatpush2.xpose.msra.mxu0 0.0
  %1474 = vmatprep.mubr.f32.mxu0 0.0
  %v1475 = vand.u32 %v790, 4294901760
  %1476 = vmatmul.mubr.f32.gmra.mxu0 %v1475
  %v1477 = vpop.f32.mrf.mxu0
  %v1478 = vadd.f32 %v1391, %v1477
  %v1479 = vpop.f32.mrf.mxu0
  %1480 = vdwg.mxu0
  %v1481 = vmul.f32 %v764, 2.0
  %v1482 = vmul.f32 %v770, 2.0
  %v1483 = vlaneseq
  %v1484 = vshrl.u32 %v1483, 7
  %v1485 = vsub.s32 0, %v1484
  %v1486 = vrot.slane %v1478, %v1485
  %v1487 = vsub.f32 %v1486, %v1481
  %v1488 = vsub.f32 %v1486, %v1482
  %1490 = vset.pattern.permute.xlu0 0
  %1491 = vperm.xlu0 %1490, %v32
  %v1492 = vpop.permute.xlu0 %1491
  %1495 = vset.pattern.permute.xlu0 0
  %1496 = vperm.xlu0 %1495, %v33
  %v1497 = vpop.permute.xlu0 %1496
  %v1499 = vadd.f32 %v1487, %v1492
  %v1500 = vadd.f32 %v1488, %v1497
  %v1501 = vand.u32 2147483647, %v1499
  %v1502 = vand.u32 2147483647, %v1500
  %v1503 = vmin.f32 %v1501, %v1502
  %v1504 = vrot.slane %v1503, 4
  %v1505 = vmin.f32 %v1503, %v1504
  %v1506 = vrot.slane %v1505, 2
  %v1507 = vmin.f32 %v1505, %v1506
  %v1508 = vrot.slane %v1507, 1
  %v1509 = vmin.f32 %v1507, %v1508
  %v1510 = vlaneseq
  %v1511 = vshrl.u32 %v1510, 7
  %v1512 = vadd.s32 %v1511, 8
  %v1513 = vcvt.s32.f32 %v1511
  %v1514 = vcvt.s32.f32 %v1512
  %vm1515 = vcmp.eq.f32.partialorder %v1501, %v1509
  %vm1516 = vcmp.eq.f32.partialorder %v1502, %v1509
  %v1517 = vsel %vm1515, %v1513, 16.0
  %v1518 = vsel %vm1516, %v1514, 16.0
  %v1519 = vmin.f32 %v1517, %v1518
  %v1520 = vrot.slane %v1519, 4
  %v1521 = vmin.f32 %v1519, %v1520
  %v1522 = vrot.slane %v1521, 2
  %v1523 = vmin.f32 %v1521, %v1522
  %v1524 = vrot.slane %v1523, 1
  %v1525 = vmin.f32 %v1523, %v1524
  %v1526 = vcvt.f32.s32.to.zero.pseudo %v1525
  %1527 = vst [vmem:[%s3] sm:$0x1] %v1526
  // Predicated region
  $region14: #{kmeans_assign.1} parent=0 // pred_check
    _
  $region15: #{kmeans_assign.1} parent=0 // pred_check_branch
    %1529 = sbr.rel (0) target = $region17
  $region16: #{kmeans_assign.1} parent=0 // pred_region
    _
  $region17: #{kmeans_assign.1} parent=0 // pred_fallthru
    _
  // Predicated region
  $region18: #{kmeans_assign.1} parent=0 // pred_check
    _
  $region19: #{kmeans_assign.1} parent=0 // pred_check_branch
    %1531 = sbr.rel (0) target = $region21
  $region20: #{kmeans_assign.1} parent=0 // pred_region
    _
  $region21: #{kmeans_assign.1} parent=0 // pred_fallthru
    _

</llo_original>
